<compile_context>
chip_gen: v6e
topology: v6e:2x2x1
jax: 0.10.0
libtpu: 0.0.40
codegen_flags: <defaults>
</compile_context>

<pallas_src>
import functools

import jax
import jax.numpy as jnp
from jax.experimental import pallas as pl
from jax.experimental.pallas import tpu as pltpu

KSIZE = 7
PAD = 3


def _light_cbam_kernel(x_ref, w1t_ref, b1_ref, w2_ref, b2_ref, wsp_ref, bsp_ref,
                       o_ref, *, H, W, NB):
    # x_ref/o_ref: (NB, C, H*W) lane-dense; w1t: (C, Cr); b1: (1, Cr); w2: (C, Cr); b2: (C, 1)
    # wsp: (2*7*7,) SMEM; bsp: (1,) SMEM
    HW = H * W

    # ---- hoisted once per grid step: conv weights (SMEM scalars) & border masks ----
    w = [wsp_ref[i] for i in range(2 * KSIZE * KSIZE)]
    bias = bsp_ref[0]

    pos = jax.lax.broadcasted_iota(jnp.int32, (1, HW), 1)            # flat spatial index p
    posf = pos.astype(jnp.float32)
    # col(p) = p % W without integer div on the VPU (exact for these magnitudes)
    colf = posf - float(W) * jnp.floor((posf + 0.5) * (1.0 / float(W)))

    rowmask = []   # rowmask[di][p] = 1.0 iff 0 <= row(p) + (di-PAD) < H
    colmask = []   # colmask[dj][p] = 1.0 iff 0 <= col(p) + (dj-PAD) < W
    for d in range(KSIZE):
        dr = d - PAD
        lo = max(0, -dr) * W
        hi = min(H, H - dr) * W
        rowmask.append(jnp.where((pos >= lo) & (pos < hi), 1.0, 0.0).astype(jnp.float32))
        clo = float(max(0, -dr))
        chi = float(min(W, W - dr))
        colmask.append(jnp.where((colf >= clo) & (colf < chi), 1.0, 0.0).astype(jnp.float32))

    w1t = w1t_ref[...]
    b1 = b1_ref[...]
    w2 = w2_ref[...]
    b2 = b2_ref[...]

    for s in range(NB):
        x = x_ref[s]                                                  # (C, HW)

        # ---- channel attention: global avg pool + tiny MLP (VPU/XLU only, no MXU) ----
        pooled = jnp.mean(x, axis=1, keepdims=True)                   # (C, 1)   AdaptiveAvgPool2d(1)
        h = jnp.sum(w1t * pooled, axis=0, keepdims=True) + b1         # (1, Cr)  1x1 conv
        h = jnp.maximum(h, 0.0)                                       # ReLU
        ca = jnp.sum(w2 * h, axis=1, keepdims=True) + b2              # (C, 1)   1x1 conv
        ca = jax.nn.sigmoid(ca)                                       # Sigmoid
        x2 = x * ca                                                   # x * channel_att(x)

        # ---- spatial-attention inputs: channel mean / max, kept flat (1, HW) ----
        avg = jnp.mean(x2, axis=0, keepdims=True)
        mx = jnp.max(x2, axis=0, keepdims=True)

        # ---- 7x7 "same" conv (2->1, padding=3) via circular lane rolls + border masks ----
        # out[p] = bias + sum_{ci,di,dj} w[ci,di,dj] * rowmask[di][p] * colmask[dj][p]
        #                               * in_ci[p + (di-PAD)*W + (dj-PAD)]
        # Row shifts (multiples of W) + row masks are pre-applied (any mismatch at
        # column-wrapped positions is zeroed by colmask afterwards); then each of the 7
        # column offsets gets one small roll + mask -> 18 rolls total, no padded scratch.
        rowshifted = []                                               # index [ci*KSIZE + di]
        for m in (avg, mx):
            for di in range(KSIZE):
                dr = di - PAD
                shift = (-dr * W) % HW
                v = pltpu.roll(m, shift, 1) if shift else m
                rowshifted.append(rowmask[di] * v)

        acc = jnp.full((1, HW), bias, dtype=jnp.float32)
        for dj in range(KSIZE):
            dc = dj - PAD
            s_dj = None                                               # independent chain per dj
            for ci in range(2):
                for di in range(KSIZE):
                    wt = w[ci * KSIZE * KSIZE + di * KSIZE + dj]
                    term = wt * rowshifted[ci * KSIZE + di]
                    s_dj = term if s_dj is None else s_dj + term
            shift = (-dc) % HW
            v = pltpu.roll(s_dj, shift, 1) if shift else s_dj
            acc = acc + colmask[dj] * v
        sa = jax.nn.sigmoid(acc)                                      # (1, HW)

        # TODO(synk): DropPath(0.1) is train-only stochastic depth; eval-mode identity is used.
        o_ref[s] = x2 * sa + x_ref[s]                                 # x*spatial_att + identity


def _pick_block_batch(N, C, HW, elt_bytes=4, target_bytes=1 << 20):
    per_sample = max(1, C * HW * elt_bytes)
    nb = max(1, min(N, target_bytes // per_sample))
    if N >= 2:
        nb = max(1, min(nb, N // 2))    # keep >= 2 grid steps (v7x megacore / pipelining)
    while N % nb:                       # exact divisor -> no ragged last block
        nb -= 1
    return nb


def light_cbam_forward(x, params):
    N, C, H, W = x.shape
    Cr = params["w1t"].shape[1]
    HW = H * W
    x2d = x.reshape(N, C, HW)                                         # lane-dense view of x

    NB = _pick_block_batch(N, C, HW)
    block_bytes = NB * C * HW * 4
    kernel = functools.partial(_light_cbam_kernel, H=H, W=W, NB=NB)

    cost = pl.CostEstimate(
        flops=int(N * (6 * C * HW + 230 * HW + 4 * C * Cr)),
        transcendentals=int(N * (C + HW)),
        bytes_accessed=int(2 * N * C * HW * 4
                           + (2 * C * Cr + Cr + C + 2 * KSIZE * KSIZE + 1) * 4),
    )

    out2d = pl.pallas_call(
        kernel,
        out_shape=jax.ShapeDtypeStruct((N, C, HW), jnp.float32),
        grid=(N // NB,),
        in_specs=[
            pl.BlockSpec((NB, C, HW), lambda n: (n, 0, 0)),
            pl.BlockSpec((C, Cr), lambda n: (0, 0)),
            pl.BlockSpec((1, Cr), lambda n: (0, 0)),
            pl.BlockSpec((C, Cr), lambda n: (0, 0)),
            pl.BlockSpec((C, 1), lambda n: (0, 0)),
            pl.BlockSpec(memory_space=pltpu.MemorySpace.SMEM),
            pl.BlockSpec(memory_space=pltpu.MemorySpace.SMEM),
        ],
        out_specs=pl.BlockSpec((NB, C, HW), lambda n: (n, 0, 0)),
        compiler_params=pltpu.CompilerParams(
            dimension_semantics=("parallel",),
            # 2x double-buffered in + out blocks + params + headroom; < v7x 64 MiB physical
            vmem_limit_bytes=int(min(48 * 2**20, max(16 * 2**20, 6 * block_bytes))),
        ),
        cost_estimate=cost,
    )(x2d, params["w1t"], params["b1"], params["w2"], params["b2"],
      params["wsp"], params["bsp"])

    return out2d.reshape(N, C, H, W)


def light_cbam_reference(x, params):
    # Pure-JAX reference of the PyTorch forward (eval mode).
    pooled = jnp.mean(x, axis=(2, 3))                                  # (N, C)
    h = jax.nn.relu(pooled @ params["w1t"] + params["b1"])             # (N, Cr)
    ca = jax.nn.sigmoid(h @ params["w2"].T + params["b2"][:, 0])       # (N, C)
    x2 = x * ca[:, :, None, None]
    avg = jnp.mean(x2, axis=1, keepdims=True)
    mx = jnp.max(x2, axis=1, keepdims=True)
    sp_in = jnp.concatenate([avg, mx], axis=1)                         # (N, 2, H, W)
    wconv = params["wsp"].reshape(1, 2, KSIZE, KSIZE)
    sa = jax.lax.conv_general_dilated(
        sp_in, wconv, window_strides=(1, 1), padding=[(PAD, PAD), (PAD, PAD)],
        dimension_numbers=("NCHW", "OIHW", "NCHW")) + params["bsp"][0]
    sa = jax.nn.sigmoid(sa)
    return x2 * sa + x


if __name__ == "__main__":
    N, C, H, W = 2, 32, 16, 16          # channels must be >= 16 (channels // 16 hidden dim)
    Cr = C // 16

    key = jax.random.PRNGKey(0)
    kx, k1, k2, k3, k4, k5, k6 = jax.random.split(key, 7)
    x = jax.random.normal(kx, (N, C, H, W), jnp.float32)
    params = {
        # Conv2d(C, C//16, 1): PyTorch weight (Cr, C, 1, 1) -> stored TRANSPOSED as (C, Cr)
        "w1t": (jax.random.normal(k1, (Cr, C), jnp.float32) / (C ** 0.5)).T,
        "b1": jax.random.normal(k2, (1, Cr), jnp.float32) * 0.1,
        # Conv2d(C//16, C, 1): weight (C, Cr, 1, 1) -> (C, Cr), bias (C, 1)
        "w2": jax.random.normal(k3, (C, Cr), jnp.float32) / (Cr ** 0.5),
        "b2": jax.random.normal(k4, (C, 1), jnp.float32) * 0.1,
        # Conv2d(2, 1, 7, padding=3): weight (1, 2, 7, 7) flattened, bias (1,)
        "wsp": (jax.random.normal(k5, (1, 2, KSIZE, KSIZE), jnp.float32)
                / ((2.0 * KSIZE * KSIZE) ** 0.5)).reshape(-1),
        "bsp": jax.random.normal(k6, (1,), jnp.float32) * 0.1,
    }

    out = jax.jit(light_cbam_forward)(x, params)
    out = jax.block_until_ready(out)

    ref = light_cbam_reference(x, params)
    assert out.shape == x.shape
    err = float(jnp.max(jnp.abs(out - ref)))
    assert jnp.allclose(out, ref, rtol=2e-2, atol=2e-2), err
    print("KERNEL_OK")
</pallas_src>

<mosaic_0001>
module attributes {stable_mosaic.version = 11 : i64} {
  func.func @_light_cbam_kernel(%arg0: i32, %arg1: memref<1x32x256xf32, #tpu.memory_space<vmem>>, %arg2: memref<32x2xf32, #tpu.memory_space<vmem>>, %arg3: memref<1x2xf32, #tpu.memory_space<vmem>>, %arg4: memref<32x2xf32, #tpu.memory_space<vmem>>, %arg5: memref<32x1xf32, #tpu.memory_space<vmem>>, %arg6: memref<98xf32, #tpu.memory_space<smem>>, %arg7: memref<1xf32, #tpu.memory_space<smem>>, %arg8: memref<1x32x256xf32, #tpu.memory_space<vmem>>) attributes {dimension_semantics = [#tpu.dimension_semantics<parallel>], iteration_bounds = array<i64: 2>, scalar_prefetch = 0 : i64, scratch_operands = 0 : i64, tpu.core_type = #tpu.core_type<tc>, window_params = [{transform_indices = @transform_0, window_bounds = array<i64: 1, 32, 256>}, {pipeline_mode = #tpu.pipeline_mode<synchronous>, transform_indices = @transform_1, window_bounds = array<i64: 32, 2>}, {pipeline_mode = #tpu.pipeline_mode<synchronous>, transform_indices = @transform_2, window_bounds = array<i64: 1, 2>}, {pipeline_mode = #tpu.pipeline_mode<synchronous>, transform_indices = @transform_3, window_bounds = array<i64: 32, 2>}, {pipeline_mode = #tpu.pipeline_mode<synchronous>, transform_indices = @transform_4, window_bounds = array<i64: 32, 1>}, {transform_indices = @transform_5, window_bounds = array<i64: 98>}, {transform_indices = @transform_6, window_bounds = array<i64: 1>}, {transform_indices = @transform_7, window_bounds = array<i64: 1, 32, 256>}]} {
    %c0 = arith.constant 0 : index
    %0 = memref.load %arg6[%c0] : memref<98xf32, #tpu.memory_space<smem>>
    %c1 = arith.constant 1 : index
    %1 = memref.load %arg6[%c1] : memref<98xf32, #tpu.memory_space<smem>>
    %c2 = arith.constant 2 : index
    %2 = memref.load %arg6[%c2] : memref<98xf32, #tpu.memory_space<smem>>
    %c3 = arith.constant 3 : index
    %3 = memref.load %arg6[%c3] : memref<98xf32, #tpu.memory_space<smem>>
    %c4 = arith.constant 4 : index
    %4 = memref.load %arg6[%c4] : memref<98xf32, #tpu.memory_space<smem>>
    %c5 = arith.constant 5 : index
    %5 = memref.load %arg6[%c5] : memref<98xf32, #tpu.memory_space<smem>>
    %c6 = arith.constant 6 : index
    %6 = memref.load %arg6[%c6] : memref<98xf32, #tpu.memory_space<smem>>
    %c7 = arith.constant 7 : index
    %7 = memref.load %arg6[%c7] : memref<98xf32, #tpu.memory_space<smem>>
    %c8 = arith.constant 8 : index
    %8 = memref.load %arg6[%c8] : memref<98xf32, #tpu.memory_space<smem>>
    %c9 = arith.constant 9 : index
    %9 = memref.load %arg6[%c9] : memref<98xf32, #tpu.memory_space<smem>>
    %c10 = arith.constant 10 : index
    %10 = memref.load %arg6[%c10] : memref<98xf32, #tpu.memory_space<smem>>
    %c11 = arith.constant 11 : index
    %11 = memref.load %arg6[%c11] : memref<98xf32, #tpu.memory_space<smem>>
    %c12 = arith.constant 12 : index
    %12 = memref.load %arg6[%c12] : memref<98xf32, #tpu.memory_space<smem>>
    %c13 = arith.constant 13 : index
    %13 = memref.load %arg6[%c13] : memref<98xf32, #tpu.memory_space<smem>>
    %c14 = arith.constant 14 : index
    %14 = memref.load %arg6[%c14] : memref<98xf32, #tpu.memory_space<smem>>
    %c15 = arith.constant 15 : index
    %15 = memref.load %arg6[%c15] : memref<98xf32, #tpu.memory_space<smem>>
    %c16 = arith.constant 16 : index
    %16 = memref.load %arg6[%c16] : memref<98xf32, #tpu.memory_space<smem>>
    %c17 = arith.constant 17 : index
    %17 = memref.load %arg6[%c17] : memref<98xf32, #tpu.memory_space<smem>>
    %c18 = arith.constant 18 : index
    %18 = memref.load %arg6[%c18] : memref<98xf32, #tpu.memory_space<smem>>
    %c19 = arith.constant 19 : index
    %19 = memref.load %arg6[%c19] : memref<98xf32, #tpu.memory_space<smem>>
    %c20 = arith.constant 20 : index
    %20 = memref.load %arg6[%c20] : memref<98xf32, #tpu.memory_space<smem>>
    %c21 = arith.constant 21 : index
    %21 = memref.load %arg6[%c21] : memref<98xf32, #tpu.memory_space<smem>>
    %c22 = arith.constant 22 : index
    %22 = memref.load %arg6[%c22] : memref<98xf32, #tpu.memory_space<smem>>
    %c23 = arith.constant 23 : index
    %23 = memref.load %arg6[%c23] : memref<98xf32, #tpu.memory_space<smem>>
    %c24 = arith.constant 24 : index
    %24 = memref.load %arg6[%c24] : memref<98xf32, #tpu.memory_space<smem>>
    %c25 = arith.constant 25 : index
    %25 = memref.load %arg6[%c25] : memref<98xf32, #tpu.memory_space<smem>>
    %c26 = arith.constant 26 : index
    %26 = memref.load %arg6[%c26] : memref<98xf32, #tpu.memory_space<smem>>
    %c27 = arith.constant 27 : index
    %27 = memref.load %arg6[%c27] : memref<98xf32, #tpu.memory_space<smem>>
    %c28 = arith.constant 28 : index
    %28 = memref.load %arg6[%c28] : memref<98xf32, #tpu.memory_space<smem>>
    %c29 = arith.constant 29 : index
    %29 = memref.load %arg6[%c29] : memref<98xf32, #tpu.memory_space<smem>>
    %c30 = arith.constant 30 : index
    %30 = memref.load %arg6[%c30] : memref<98xf32, #tpu.memory_space<smem>>
    %c31 = arith.constant 31 : index
    %31 = memref.load %arg6[%c31] : memref<98xf32, #tpu.memory_space<smem>>
    %c32 = arith.constant 32 : index
    %32 = memref.load %arg6[%c32] : memref<98xf32, #tpu.memory_space<smem>>
    %c33 = arith.constant 33 : index
    %33 = memref.load %arg6[%c33] : memref<98xf32, #tpu.memory_space<smem>>
    %c34 = arith.constant 34 : index
    %34 = memref.load %arg6[%c34] : memref<98xf32, #tpu.memory_space<smem>>
    %c35 = arith.constant 35 : index
    %35 = memref.load %arg6[%c35] : memref<98xf32, #tpu.memory_space<smem>>
    %c36 = arith.constant 36 : index
    %36 = memref.load %arg6[%c36] : memref<98xf32, #tpu.memory_space<smem>>
    %c37 = arith.constant 37 : index
    %37 = memref.load %arg6[%c37] : memref<98xf32, #tpu.memory_space<smem>>
    %c38 = arith.constant 38 : index
    %38 = memref.load %arg6[%c38] : memref<98xf32, #tpu.memory_space<smem>>
    %c39 = arith.constant 39 : index
    %39 = memref.load %arg6[%c39] : memref<98xf32, #tpu.memory_space<smem>>
    %c40 = arith.constant 40 : index
    %40 = memref.load %arg6[%c40] : memref<98xf32, #tpu.memory_space<smem>>
    %c41 = arith.constant 41 : index
    %41 = memref.load %arg6[%c41] : memref<98xf32, #tpu.memory_space<smem>>
    %c42 = arith.constant 42 : index
    %42 = memref.load %arg6[%c42] : memref<98xf32, #tpu.memory_space<smem>>
    %c43 = arith.constant 43 : index
    %43 = memref.load %arg6[%c43] : memref<98xf32, #tpu.memory_space<smem>>
    %c44 = arith.constant 44 : index
    %44 = memref.load %arg6[%c44] : memref<98xf32, #tpu.memory_space<smem>>
    %c45 = arith.constant 45 : index
    %45 = memref.load %arg6[%c45] : memref<98xf32, #tpu.memory_space<smem>>
    %c46 = arith.constant 46 : index
    %46 = memref.load %arg6[%c46] : memref<98xf32, #tpu.memory_space<smem>>
    %c47 = arith.constant 47 : index
    %47 = memref.load %arg6[%c47] : memref<98xf32, #tpu.memory_space<smem>>
    %c48 = arith.constant 48 : index
    %48 = memref.load %arg6[%c48] : memref<98xf32, #tpu.memory_space<smem>>
    %c49 = arith.constant 49 : index
    %49 = memref.load %arg6[%c49] : memref<98xf32, #tpu.memory_space<smem>>
    %c50 = arith.constant 50 : index
    %50 = memref.load %arg6[%c50] : memref<98xf32, #tpu.memory_space<smem>>
    %c51 = arith.constant 51 : index
    %51 = memref.load %arg6[%c51] : memref<98xf32, #tpu.memory_space<smem>>
    %c52 = arith.constant 52 : index
    %52 = memref.load %arg6[%c52] : memref<98xf32, #tpu.memory_space<smem>>
    %c53 = arith.constant 53 : index
    %53 = memref.load %arg6[%c53] : memref<98xf32, #tpu.memory_space<smem>>
    %c54 = arith.constant 54 : index
    %54 = memref.load %arg6[%c54] : memref<98xf32, #tpu.memory_space<smem>>
    %c55 = arith.constant 55 : index
    %55 = memref.load %arg6[%c55] : memref<98xf32, #tpu.memory_space<smem>>
    %c56 = arith.constant 56 : index
    %56 = memref.load %arg6[%c56] : memref<98xf32, #tpu.memory_space<smem>>
    %c57 = arith.constant 57 : index
    %57 = memref.load %arg6[%c57] : memref<98xf32, #tpu.memory_space<smem>>
    %c58 = arith.constant 58 : index
    %58 = memref.load %arg6[%c58] : memref<98xf32, #tpu.memory_space<smem>>
    %c59 = arith.constant 59 : index
    %59 = memref.load %arg6[%c59] : memref<98xf32, #tpu.memory_space<smem>>
    %c60 = arith.constant 60 : index
    %60 = memref.load %arg6[%c60] : memref<98xf32, #tpu.memory_space<smem>>
    %c61 = arith.constant 61 : index
    %61 = memref.load %arg6[%c61] : memref<98xf32, #tpu.memory_space<smem>>
    %c62 = arith.constant 62 : index
    %62 = memref.load %arg6[%c62] : memref<98xf32, #tpu.memory_space<smem>>
    %c63 = arith.constant 63 : index
    %63 = memref.load %arg6[%c63] : memref<98xf32, #tpu.memory_space<smem>>
    %c64 = arith.constant 64 : index
    %64 = memref.load %arg6[%c64] : memref<98xf32, #tpu.memory_space<smem>>
    %c65 = arith.constant 65 : index
    %65 = memref.load %arg6[%c65] : memref<98xf32, #tpu.memory_space<smem>>
    %c66 = arith.constant 66 : index
    %66 = memref.load %arg6[%c66] : memref<98xf32, #tpu.memory_space<smem>>
    %c67 = arith.constant 67 : index
    %67 = memref.load %arg6[%c67] : memref<98xf32, #tpu.memory_space<smem>>
    %c68 = arith.constant 68 : index
    %68 = memref.load %arg6[%c68] : memref<98xf32, #tpu.memory_space<smem>>
    %c69 = arith.constant 69 : index
    %69 = memref.load %arg6[%c69] : memref<98xf32, #tpu.memory_space<smem>>
    %c70 = arith.constant 70 : index
    %70 = memref.load %arg6[%c70] : memref<98xf32, #tpu.memory_space<smem>>
    %c71 = arith.constant 71 : index
    %71 = memref.load %arg6[%c71] : memref<98xf32, #tpu.memory_space<smem>>
    %c72 = arith.constant 72 : index
    %72 = memref.load %arg6[%c72] : memref<98xf32, #tpu.memory_space<smem>>
    %c73 = arith.constant 73 : index
    %73 = memref.load %arg6[%c73] : memref<98xf32, #tpu.memory_space<smem>>
    %c74 = arith.constant 74 : index
    %74 = memref.load %arg6[%c74] : memref<98xf32, #tpu.memory_space<smem>>
    %c75 = arith.constant 75 : index
    %75 = memref.load %arg6[%c75] : memref<98xf32, #tpu.memory_space<smem>>
    %c76 = arith.constant 76 : index
    %76 = memref.load %arg6[%c76] : memref<98xf32, #tpu.memory_space<smem>>
    %c77 = arith.constant 77 : index
    %77 = memref.load %arg6[%c77] : memref<98xf32, #tpu.memory_space<smem>>
    %c78 = arith.constant 78 : index
    %78 = memref.load %arg6[%c78] : memref<98xf32, #tpu.memory_space<smem>>
    %c79 = arith.constant 79 : index
    %79 = memref.load %arg6[%c79] : memref<98xf32, #tpu.memory_space<smem>>
    %c80 = arith.constant 80 : index
    %80 = memref.load %arg6[%c80] : memref<98xf32, #tpu.memory_space<smem>>
    %c81 = arith.constant 81 : index
    %81 = memref.load %arg6[%c81] : memref<98xf32, #tpu.memory_space<smem>>
    %c82 = arith.constant 82 : index
    %82 = memref.load %arg6[%c82] : memref<98xf32, #tpu.memory_space<smem>>
    %c83 = arith.constant 83 : index
    %83 = memref.load %arg6[%c83] : memref<98xf32, #tpu.memory_space<smem>>
    %c84 = arith.constant 84 : index
    %84 = memref.load %arg6[%c84] : memref<98xf32, #tpu.memory_space<smem>>
    %c85 = arith.constant 85 : index
    %85 = memref.load %arg6[%c85] : memref<98xf32, #tpu.memory_space<smem>>
    %c86 = arith.constant 86 : index
    %86 = memref.load %arg6[%c86] : memref<98xf32, #tpu.memory_space<smem>>
    %c87 = arith.constant 87 : index
    %87 = memref.load %arg6[%c87] : memref<98xf32, #tpu.memory_space<smem>>
    %c88 = arith.constant 88 : index
    %88 = memref.load %arg6[%c88] : memref<98xf32, #tpu.memory_space<smem>>
    %c89 = arith.constant 89 : index
    %89 = memref.load %arg6[%c89] : memref<98xf32, #tpu.memory_space<smem>>
    %c90 = arith.constant 90 : index
    %90 = memref.load %arg6[%c90] : memref<98xf32, #tpu.memory_space<smem>>
    %c91 = arith.constant 91 : index
    %91 = memref.load %arg6[%c91] : memref<98xf32, #tpu.memory_space<smem>>
    %c92 = arith.constant 92 : index
    %92 = memref.load %arg6[%c92] : memref<98xf32, #tpu.memory_space<smem>>
    %c93 = arith.constant 93 : index
    %93 = memref.load %arg6[%c93] : memref<98xf32, #tpu.memory_space<smem>>
    %c94 = arith.constant 94 : index
    %94 = memref.load %arg6[%c94] : memref<98xf32, #tpu.memory_space<smem>>
    %c95 = arith.constant 95 : index
    %95 = memref.load %arg6[%c95] : memref<98xf32, #tpu.memory_space<smem>>
    %c96 = arith.constant 96 : index
    %96 = memref.load %arg6[%c96] : memref<98xf32, #tpu.memory_space<smem>>
    %c97 = arith.constant 97 : index
    %97 = memref.load %arg6[%c97] : memref<98xf32, #tpu.memory_space<smem>>
    %c0_0 = arith.constant 0 : index
    %98 = memref.load %arg7[%c0_0] : memref<1xf32, #tpu.memory_space<smem>>
    %99 = tpu.iota {dimensions = array<i32: 1>} : vector<1x256xi32>
    %100 = arith.sitofp %99 : vector<1x256xi32> to vector<1x256xf32>
    %cst = arith.constant 5.000000e-01 : f32
    %101 = vector.broadcast %cst : f32 to vector<1x256xf32>
    %102 = arith.addf %100, %101 : vector<1x256xf32>
    %cst_1 = arith.constant 6.250000e-02 : f32
    %103 = vector.broadcast %cst_1 : f32 to vector<1x256xf32>
    %104 = arith.mulf %102, %103 : vector<1x256xf32>
    %105 = math.floor %104 : vector<1x256xf32>
    %cst_2 = arith.constant 1.600000e+01 : f32
    %106 = vector.broadcast %cst_2 : f32 to vector<1x256xf32>
    %107 = arith.mulf %106, %105 : vector<1x256xf32>
    %108 = arith.subf %100, %107 : vector<1x256xf32>
    %c48_i32 = arith.constant 48 : i32
    %109 = vector.broadcast %c48_i32 : i32 to vector<1x256xi32>
    %110 = arith.cmpi sge, %99, %109 : vector<1x256xi32>
    %c256_i32 = arith.constant 256 : i32
    %111 = vector.broadcast %c256_i32 : i32 to vector<1x256xi32>
    %112 = arith.cmpi slt, %99, %111 : vector<1x256xi32>
    %113 = arith.andi %110, %112 : vector<1x256xi1>
    %cst_3 = arith.constant 1.000000e+00 : f32
    %cst_4 = arith.constant 0.000000e+00 : f32
    %114 = vector.broadcast %cst_3 : f32 to vector<1x256xf32>
    %115 = vector.broadcast %cst_4 : f32 to vector<1x256xf32>
    %116 = arith.select %113, %114, %115 : vector<1x256xi1>, vector<1x256xf32>
    %cst_5 = arith.constant 3.000000e+00 : f32
    %117 = vector.broadcast %cst_5 : f32 to vector<1x256xf32>
    %118 = arith.cmpf oge, %108, %117 : vector<1x256xf32>
    %cst_6 = arith.constant 1.600000e+01 : f32
    %119 = vector.broadcast %cst_6 : f32 to vector<1x256xf32>
    %120 = arith.cmpf olt, %108, %119 : vector<1x256xf32>
    %121 = arith.andi %118, %120 : vector<1x256xi1>
    %cst_7 = arith.constant 1.000000e+00 : f32
    %cst_8 = arith.constant 0.000000e+00 : f32
    %122 = vector.broadcast %cst_7 : f32 to vector<1x256xf32>
    %123 = vector.broadcast %cst_8 : f32 to vector<1x256xf32>
    %124 = arith.select %121, %122, %123 : vector<1x256xi1>, vector<1x256xf32>
    %c32_i32 = arith.constant 32 : i32
    %125 = vector.broadcast %c32_i32 : i32 to vector<1x256xi32>
    %126 = arith.cmpi sge, %99, %125 : vector<1x256xi32>
    %c256_i32_9 = arith.constant 256 : i32
    %127 = vector.broadcast %c256_i32_9 : i32 to vector<1x256xi32>
    %128 = arith.cmpi slt, %99, %127 : vector<1x256xi32>
    %129 = arith.andi %126, %128 : vector<1x256xi1>
    %cst_10 = arith.constant 1.000000e+00 : f32
    %cst_11 = arith.constant 0.000000e+00 : f32
    %130 = vector.broadcast %cst_10 : f32 to vector<1x256xf32>
    %131 = vector.broadcast %cst_11 : f32 to vector<1x256xf32>
    %132 = arith.select %129, %130, %131 : vector<1x256xi1>, vector<1x256xf32>
    %cst_12 = arith.constant 2.000000e+00 : f32
    %133 = vector.broadcast %cst_12 : f32 to vector<1x256xf32>
    %134 = arith.cmpf oge, %108, %133 : vector<1x256xf32>
    %cst_13 = arith.constant 1.600000e+01 : f32
    %135 = vector.broadcast %cst_13 : f32 to vector<1x256xf32>
    %136 = arith.cmpf olt, %108, %135 : vector<1x256xf32>
    %137 = arith.andi %134, %136 : vector<1x256xi1>
    %cst_14 = arith.constant 1.000000e+00 : f32
    %cst_15 = arith.constant 0.000000e+00 : f32
    %138 = vector.broadcast %cst_14 : f32 to vector<1x256xf32>
    %139 = vector.broadcast %cst_15 : f32 to vector<1x256xf32>
    %140 = arith.select %137, %138, %139 : vector<1x256xi1>, vector<1x256xf32>
    %c16_i32 = arith.constant 16 : i32
    %141 = vector.broadcast %c16_i32 : i32 to vector<1x256xi32>
    %142 = arith.cmpi sge, %99, %141 : vector<1x256xi32>
    %c256_i32_16 = arith.constant 256 : i32
    %143 = vector.broadcast %c256_i32_16 : i32 to vector<1x256xi32>
    %144 = arith.cmpi slt, %99, %143 : vector<1x256xi32>
    %145 = arith.andi %142, %144 : vector<1x256xi1>
    %cst_17 = arith.constant 1.000000e+00 : f32
    %cst_18 = arith.constant 0.000000e+00 : f32
    %146 = vector.broadcast %cst_17 : f32 to vector<1x256xf32>
    %147 = vector.broadcast %cst_18 : f32 to vector<1x256xf32>
    %148 = arith.select %145, %146, %147 : vector<1x256xi1>, vector<1x256xf32>
    %cst_19 = arith.constant 1.000000e+00 : f32
    %149 = vector.broadcast %cst_19 : f32 to vector<1x256xf32>
    %150 = arith.cmpf oge, %108, %149 : vector<1x256xf32>
    %cst_20 = arith.constant 1.600000e+01 : f32
    %151 = vector.broadcast %cst_20 : f32 to vector<1x256xf32>
    %152 = arith.cmpf olt, %108, %151 : vector<1x256xf32>
    %153 = arith.andi %150, %152 : vector<1x256xi1>
    %cst_21 = arith.constant 1.000000e+00 : f32
    %cst_22 = arith.constant 0.000000e+00 : f32
    %154 = vector.broadcast %cst_21 : f32 to vector<1x256xf32>
    %155 = vector.broadcast %cst_22 : f32 to vector<1x256xf32>
    %156 = arith.select %153, %154, %155 : vector<1x256xi1>, vector<1x256xf32>
    %c0_i32 = arith.constant 0 : i32
    %157 = vector.broadcast %c0_i32 : i32 to vector<1x256xi32>
    %158 = arith.cmpi sge, %99, %157 : vector<1x256xi32>
    %c256_i32_23 = arith.constant 256 : i32
    %159 = vector.broadcast %c256_i32_23 : i32 to vector<1x256xi32>
    %160 = arith.cmpi slt, %99, %159 : vector<1x256xi32>
    %161 = arith.andi %158, %160 : vector<1x256xi1>
    %cst_24 = arith.constant 1.000000e+00 : f32
    %cst_25 = arith.constant 0.000000e+00 : f32
    %162 = vector.broadcast %cst_24 : f32 to vector<1x256xf32>
    %163 = vector.broadcast %cst_25 : f32 to vector<1x256xf32>
    %164 = arith.select %161, %162, %163 : vector<1x256xi1>, vector<1x256xf32>
    %cst_26 = arith.constant 0.000000e+00 : f32
    %165 = vector.broadcast %cst_26 : f32 to vector<1x256xf32>
    %166 = arith.cmpf oge, %108, %165 : vector<1x256xf32>
    %cst_27 = arith.constant 1.600000e+01 : f32
    %167 = vector.broadcast %cst_27 : f32 to vector<1x256xf32>
    %168 = arith.cmpf olt, %108, %167 : vector<1x256xf32>
    %169 = arith.andi %166, %168 : vector<1x256xi1>
    %cst_28 = arith.constant 1.000000e+00 : f32
    %cst_29 = arith.constant 0.000000e+00 : f32
    %170 = vector.broadcast %cst_28 : f32 to vector<1x256xf32>
    %171 = vector.broadcast %cst_29 : f32 to vector<1x256xf32>
    %172 = arith.select %169, %170, %171 : vector<1x256xi1>, vector<1x256xf32>
    %c0_i32_30 = arith.constant 0 : i32
    %173 = vector.broadcast %c0_i32_30 : i32 to vector<1x256xi32>
    %174 = arith.cmpi sge, %99, %173 : vector<1x256xi32>
    %c240_i32 = arith.constant 240 : i32
    %175 = vector.broadcast %c240_i32 : i32 to vector<1x256xi32>
    %176 = arith.cmpi slt, %99, %175 : vector<1x256xi32>
    %177 = arith.andi %174, %176 : vector<1x256xi1>
    %cst_31 = arith.constant 1.000000e+00 : f32
    %cst_32 = arith.constant 0.000000e+00 : f32
    %178 = vector.broadcast %cst_31 : f32 to vector<1x256xf32>
    %179 = vector.broadcast %cst_32 : f32 to vector<1x256xf32>
    %180 = arith.select %177, %178, %179 : vector<1x256xi1>, vector<1x256xf32>
    %cst_33 = arith.constant 0.000000e+00 : f32
    %181 = vector.broadcast %cst_33 : f32 to vector<1x256xf32>
    %182 = arith.cmpf oge, %108, %181 : vector<1x256xf32>
    %cst_34 = arith.constant 1.500000e+01 : f32
    %183 = vector.broadcast %cst_34 : f32 to vector<1x256xf32>
    %184 = arith.cmpf olt, %108, %183 : vector<1x256xf32>
    %185 = arith.andi %182, %184 : vector<1x256xi1>
    %cst_35 = arith.constant 1.000000e+00 : f32
    %cst_36 = arith.constant 0.000000e+00 : f32
    %186 = vector.broadcast %cst_35 : f32 to vector<1x256xf32>
    %187 = vector.broadcast %cst_36 : f32 to vector<1x256xf32>
    %188 = arith.select %185, %186, %187 : vector<1x256xi1>, vector<1x256xf32>
    %c0_i32_37 = arith.constant 0 : i32
    %189 = vector.broadcast %c0_i32_37 : i32 to vector<1x256xi32>
    %190 = arith.cmpi sge, %99, %189 : vector<1x256xi32>
    %c224_i32 = arith.constant 224 : i32
    %191 = vector.broadcast %c224_i32 : i32 to vector<1x256xi32>
    %192 = arith.cmpi slt, %99, %191 : vector<1x256xi32>
    %193 = arith.andi %190, %192 : vector<1x256xi1>
    %cst_38 = arith.constant 1.000000e+00 : f32
    %cst_39 = arith.constant 0.000000e+00 : f32
    %194 = vector.broadcast %cst_38 : f32 to vector<1x256xf32>
    %195 = vector.broadcast %cst_39 : f32 to vector<1x256xf32>
    %196 = arith.select %193, %194, %195 : vector<1x256xi1>, vector<1x256xf32>
    %cst_40 = arith.constant 0.000000e+00 : f32
    %197 = vector.broadcast %cst_40 : f32 to vector<1x256xf32>
    %198 = arith.cmpf oge, %108, %197 : vector<1x256xf32>
    %cst_41 = arith.constant 1.400000e+01 : f32
    %199 = vector.broadcast %cst_41 : f32 to vector<1x256xf32>
    %200 = arith.cmpf olt, %108, %199 : vector<1x256xf32>
    %201 = arith.andi %198, %200 : vector<1x256xi1>
    %cst_42 = arith.constant 1.000000e+00 : f32
    %cst_43 = arith.constant 0.000000e+00 : f32
    %202 = vector.broadcast %cst_42 : f32 to vector<1x256xf32>
    %203 = vector.broadcast %cst_43 : f32 to vector<1x256xf32>
    %204 = arith.select %201, %202, %203 : vector<1x256xi1>, vector<1x256xf32>
    %c0_i32_44 = arith.constant 0 : i32
    %205 = vector.broadcast %c0_i32_44 : i32 to vector<1x256xi32>
    %206 = arith.cmpi sge, %99, %205 : vector<1x256xi32>
    %c208_i32 = arith.constant 208 : i32
    %207 = vector.broadcast %c208_i32 : i32 to vector<1x256xi32>
    %208 = arith.cmpi slt, %99, %207 : vector<1x256xi32>
    %209 = arith.andi %206, %208 : vector<1x256xi1>
    %cst_45 = arith.constant 1.000000e+00 : f32
    %cst_46 = arith.constant 0.000000e+00 : f32
    %210 = vector.broadcast %cst_45 : f32 to vector<1x256xf32>
    %211 = vector.broadcast %cst_46 : f32 to vector<1x256xf32>
    %212 = arith.select %209, %210, %211 : vector<1x256xi1>, vector<1x256xf32>
    %cst_47 = arith.constant 0.000000e+00 : f32
    %213 = vector.broadcast %cst_47 : f32 to vector<1x256xf32>
    %214 = arith.cmpf oge, %108, %213 : vector<1x256xf32>
    %cst_48 = arith.constant 1.300000e+01 : f32
    %215 = vector.broadcast %cst_48 : f32 to vector<1x256xf32>
    %216 = arith.cmpf olt, %108, %215 : vector<1x256xf32>
    %217 = arith.andi %214, %216 : vector<1x256xi1>
    %cst_49 = arith.constant 1.000000e+00 : f32
    %cst_50 = arith.constant 0.000000e+00 : f32
    %218 = vector.broadcast %cst_49 : f32 to vector<1x256xf32>
    %219 = vector.broadcast %cst_50 : f32 to vector<1x256xf32>
    %220 = arith.select %217, %218, %219 : vector<1x256xi1>, vector<1x256xf32>
    %c0_51 = arith.constant 0 : index
    %c0_52 = arith.constant 0 : index
    %221 = vector.load %arg2[%c0_51, %c0_52] : memref<32x2xf32, #tpu.memory_space<vmem>>, vector<32x2xf32>
    %c0_53 = arith.constant 0 : index
    %c0_54 = arith.constant 0 : index
    %222 = vector.load %arg3[%c0_53, %c0_54] : memref<1x2xf32, #tpu.memory_space<vmem>>, vector<1x2xf32>
    %c0_55 = arith.constant 0 : index
    %c0_56 = arith.constant 0 : index
    %223 = vector.load %arg4[%c0_55, %c0_56] : memref<32x2xf32, #tpu.memory_space<vmem>>, vector<32x2xf32>
    %c0_57 = arith.constant 0 : index
    %c0_58 = arith.constant 0 : index
    %224 = vector.load %arg5[%c0_57, %c0_58] : memref<32x1xf32, #tpu.memory_space<vmem>>, vector<32x1xf32>
    %c0_59 = arith.constant 0 : index
    %c0_60 = arith.constant 0 : index
    %c0_61 = arith.constant 0 : index
    %225 = vector.load %arg1[%c0_59, %c0_60, %c0_61] : memref<1x32x256xf32, #tpu.memory_space<vmem>>, vector<1x32x256xf32>
    %226 = vector.shape_cast %225 : vector<1x32x256xf32> to vector<32x256xf32>
    %cst_62 = arith.constant dense<0.000000e+00> : vector<32xf32>
    %227 = vector.multi_reduction <add>, %226, %cst_62 [1] : vector<32x256xf32> to vector<32xf32>
    %228 = vector.shape_cast %227 : vector<32xf32> to vector<32x1xf32>
    %cst_63 = arith.constant 2.560000e+02 : f32
    %229 = vector.broadcast %cst_63 : f32 to vector<32x1xf32>
    %230 = arith.divf %228, %229 : vector<32x1xf32>
    %231 = vector.broadcast %230 : vector<32x1xf32> to vector<32x2xf32>
    %232 = arith.mulf %221, %231 : vector<32x2xf32>
    %cst_64 = arith.constant dense<0.000000e+00> : vector<2xf32>
    %233 = vector.multi_reduction <add>, %232, %cst_64 [0] : vector<32x2xf32> to vector<2xf32>
    %234 = vector.shape_cast %233 : vector<2xf32> to vector<1x2xf32>
    %235 = arith.addf %234, %222 : vector<1x2xf32>
    %cst_65 = arith.constant 0.000000e+00 : f32
    %236 = vector.broadcast %cst_65 : f32 to vector<1x2xf32>
    %237 = arith.maximumf %235, %236 : vector<1x2xf32>
    %238 = vector.broadcast %237 : vector<1x2xf32> to vector<32x2xf32>
    %239 = arith.mulf %223, %238 : vector<32x2xf32>
    %cst_66 = arith.constant dense<0.000000e+00> : vector<32xf32>
    %240 = vector.multi_reduction <add>, %239, %cst_66 [1] : vector<32x2xf32> to vector<32xf32>
    %241 = vector.shape_cast %240 : vector<32xf32> to vector<32x1xf32>
    %242 = arith.addf %241, %224 : vector<32x1xf32>
    %243 = arith.negf %242 : vector<32x1xf32>
    %244 = math.exp %243 : vector<32x1xf32>
    %cst_67 = arith.constant 1.000000e+00 : f32
    %245 = vector.broadcast %cst_67 : f32 to vector<32x1xf32>
    %246 = arith.addf %245, %244 : vector<32x1xf32>
    %247 = arith.divf %245, %246 : vector<32x1xf32>
    %248 = vector.broadcast %247 : vector<32x1xf32> to vector<32x256xf32>
    %249 = arith.mulf %226, %248 : vector<32x256xf32>
    %cst_68 = arith.constant dense<0.000000e+00> : vector<256xf32>
    %250 = vector.multi_reduction <add>, %249, %cst_68 [0] : vector<32x256xf32> to vector<256xf32>
    %251 = vector.shape_cast %250 : vector<256xf32> to vector<1x256xf32>
    %cst_69 = arith.constant 3.200000e+01 : f32
    %252 = vector.broadcast %cst_69 : f32 to vector<1x256xf32>
    %253 = arith.divf %251, %252 : vector<1x256xf32>
    %cst_70 = arith.constant dense<0xFF800000> : vector<256xf32>
    %254 = vector.multi_reduction <maximumf>, %249, %cst_70 [0] : vector<32x256xf32> to vector<256xf32>
    %255 = vector.shape_cast %254 : vector<256xf32> to vector<1x256xf32>
    %c48_i32_71 = arith.constant 48 : i32
    %256 = tpu.dynamic_rotate %253 by %c48_i32_71 dim 1 : vector<1x256xf32>, i32 -> vector<1x256xf32>
    %257 = arith.mulf %116, %256 : vector<1x256xf32>
    %c32_i32_72 = arith.constant 32 : i32
    %258 = tpu.dynamic_rotate %253 by %c32_i32_72 dim 1 : vector<1x256xf32>, i32 -> vector<1x256xf32>
    %259 = arith.mulf %132, %258 : vector<1x256xf32>
    %c16_i32_73 = arith.constant 16 : i32
    %260 = tpu.dynamic_rotate %253 by %c16_i32_73 dim 1 : vector<1x256xf32>, i32 -> vector<1x256xf32>
    %261 = arith.mulf %148, %260 : vector<1x256xf32>
    %262 = arith.mulf %164, %253 : vector<1x256xf32>
    %c240_i32_74 = arith.constant 240 : i32
    %263 = tpu.dynamic_rotate %253 by %c240_i32_74 dim 1 : vector<1x256xf32>, i32 -> vector<1x256xf32>
    %264 = arith.mulf %180, %263 : vector<1x256xf32>
    %c224_i32_75 = arith.constant 224 : i32
    %265 = tpu.dynamic_rotate %253 by %c224_i32_75 dim 1 : vector<1x256xf32>, i32 -> vector<1x256xf32>
    %266 = arith.mulf %196, %265 : vector<1x256xf32>
    %c208_i32_76 = arith.constant 208 : i32
    %267 = tpu.dynamic_rotate %253 by %c208_i32_76 dim 1 : vector<1x256xf32>, i32 -> vector<1x256xf32>
    %268 = arith.mulf %212, %267 : vector<1x256xf32>
    %c48_i32_77 = arith.constant 48 : i32
    %269 = tpu.dynamic_rotate %255 by %c48_i32_77 dim 1 : vector<1x256xf32>, i32 -> vector<1x256xf32>
    %270 = arith.mulf %116, %269 : vector<1x256xf32>
    %c32_i32_78 = arith.constant 32 : i32
    %271 = tpu.dynamic_rotate %255 by %c32_i32_78 dim 1 : vector<1x256xf32>, i32 -> vector<1x256xf32>
    %272 = arith.mulf %132, %271 : vector<1x256xf32>
    %c16_i32_79 = arith.constant 16 : i32
    %273 = tpu.dynamic_rotate %255 by %c16_i32_79 dim 1 : vector<1x256xf32>, i32 -> vector<1x256xf32>
    %274 = arith.mulf %148, %273 : vector<1x256xf32>
    %275 = arith.mulf %164, %255 : vector<1x256xf32>
    %c240_i32_80 = arith.constant 240 : i32
    %276 = tpu.dynamic_rotate %255 by %c240_i32_80 dim 1 : vector<1x256xf32>, i32 -> vector<1x256xf32>
    %277 = arith.mulf %180, %276 : vector<1x256xf32>
    %c224_i32_81 = arith.constant 224 : i32
    %278 = tpu.dynamic_rotate %255 by %c224_i32_81 dim 1 : vector<1x256xf32>, i32 -> vector<1x256xf32>
    %279 = arith.mulf %196, %278 : vector<1x256xf32>
    %c208_i32_82 = arith.constant 208 : i32
    %280 = tpu.dynamic_rotate %255 by %c208_i32_82 dim 1 : vector<1x256xf32>, i32 -> vector<1x256xf32>
    %281 = arith.mulf %212, %280 : vector<1x256xf32>
    %282 = vector.broadcast %98 : f32 to vector<1x256xf32>
    %283 = vector.broadcast %0 : f32 to vector<1x256xf32>
    %284 = arith.mulf %283, %257 : vector<1x256xf32>
    %285 = vector.broadcast %7 : f32 to vector<1x256xf32>
    %286 = arith.mulf %285, %259 : vector<1x256xf32>
    %287 = arith.addf %284, %286 : vector<1x256xf32>
    %288 = vector.broadcast %14 : f32 to vector<1x256xf32>
    %289 = arith.mulf %288, %261 : vector<1x256xf32>
    %290 = arith.addf %287, %289 : vector<1x256xf32>
    %291 = vector.broadcast %21 : f32 to vector<1x256xf32>
    %292 = arith.mulf %291, %262 : vector<1x256xf32>
    %293 = arith.addf %290, %292 : vector<1x256xf32>
    %294 = vector.broadcast %28 : f32 to vector<1x256xf32>
    %295 = arith.mulf %294, %264 : vector<1x256xf32>
    %296 = arith.addf %293, %295 : vector<1x256xf32>
    %297 = vector.broadcast %35 : f32 to vector<1x256xf32>
    %298 = arith.mulf %297, %266 : vector<1x256xf32>
    %299 = arith.addf %296, %298 : vector<1x256xf32>
    %300 = vector.broadcast %42 : f32 to vector<1x256xf32>
    %301 = arith.mulf %300, %268 : vector<1x256xf32>
    %302 = arith.addf %299, %301 : vector<1x256xf32>
    %303 = vector.broadcast %49 : f32 to vector<1x256xf32>
    %304 = arith.mulf %303, %270 : vector<1x256xf32>
    %305 = arith.addf %302, %304 : vector<1x256xf32>
    %306 = vector.broadcast %56 : f32 to vector<1x256xf32>
    %307 = arith.mulf %306, %272 : vector<1x256xf32>
    %308 = arith.addf %305, %307 : vector<1x256xf32>
    %309 = vector.broadcast %63 : f32 to vector<1x256xf32>
    %310 = arith.mulf %309, %274 : vector<1x256xf32>
    %311 = arith.addf %308, %310 : vector<1x256xf32>
    %312 = vector.broadcast %70 : f32 to vector<1x256xf32>
    %313 = arith.mulf %312, %275 : vector<1x256xf32>
    %314 = arith.addf %311, %313 : vector<1x256xf32>
    %315 = vector.broadcast %77 : f32 to vector<1x256xf32>
    %316 = arith.mulf %315, %277 : vector<1x256xf32>
    %317 = arith.addf %314, %316 : vector<1x256xf32>
    %318 = vector.broadcast %84 : f32 to vector<1x256xf32>
    %319 = arith.mulf %318, %279 : vector<1x256xf32>
    %320 = arith.addf %317, %319 : vector<1x256xf32>
    %321 = vector.broadcast %91 : f32 to vector<1x256xf32>
    %322 = arith.mulf %321, %281 : vector<1x256xf32>
    %323 = arith.addf %320, %322 : vector<1x256xf32>
    %c3_i32 = arith.constant 3 : i32
    %324 = tpu.dynamic_rotate %323 by %c3_i32 dim 1 : vector<1x256xf32>, i32 -> vector<1x256xf32>
    %325 = arith.mulf %124, %324 : vector<1x256xf32>
    %326 = arith.addf %282, %325 : vector<1x256xf32>
    %327 = vector.broadcast %1 : f32 to vector<1x256xf32>
    %328 = arith.mulf %327, %257 : vector<1x256xf32>
    %329 = vector.broadcast %8 : f32 to vector<1x256xf32>
    %330 = arith.mulf %329, %259 : vector<1x256xf32>
    %331 = arith.addf %328, %330 : vector<1x256xf32>
    %332 = vector.broadcast %15 : f32 to vector<1x256xf32>
    %333 = arith.mulf %332, %261 : vector<1x256xf32>
    %334 = arith.addf %331, %333 : vector<1x256xf32>
    %335 = vector.broadcast %22 : f32 to vector<1x256xf32>
    %336 = arith.mulf %335, %262 : vector<1x256xf32>
    %337 = arith.addf %334, %336 : vector<1x256xf32>
    %338 = vector.broadcast %29 : f32 to vector<1x256xf32>
    %339 = arith.mulf %338, %264 : vector<1x256xf32>
    %340 = arith.addf %337, %339 : vector<1x256xf32>
    %341 = vector.broadcast %36 : f32 to vector<1x256xf32>
    %342 = arith.mulf %341, %266 : vector<1x256xf32>
    %343 = arith.addf %340, %342 : vector<1x256xf32>
    %344 = vector.broadcast %43 : f32 to vector<1x256xf32>
    %345 = arith.mulf %344, %268 : vector<1x256xf32>
    %346 = arith.addf %343, %345 : vector<1x256xf32>
    %347 = vector.broadcast %50 : f32 to vector<1x256xf32>
    %348 = arith.mulf %347, %270 : vector<1x256xf32>
    %349 = arith.addf %346, %348 : vector<1x256xf32>
    %350 = vector.broadcast %57 : f32 to vector<1x256xf32>
    %351 = arith.mulf %350, %272 : vector<1x256xf32>
    %352 = arith.addf %349, %351 : vector<1x256xf32>
    %353 = vector.broadcast %64 : f32 to vector<1x256xf32>
    %354 = arith.mulf %353, %274 : vector<1x256xf32>
    %355 = arith.addf %352, %354 : vector<1x256xf32>
    %356 = vector.broadcast %71 : f32 to vector<1x256xf32>
    %357 = arith.mulf %356, %275 : vector<1x256xf32>
    %358 = arith.addf %355, %357 : vector<1x256xf32>
    %359 = vector.broadcast %78 : f32 to vector<1x256xf32>
    %360 = arith.mulf %359, %277 : vector<1x256xf32>
    %361 = arith.addf %358, %360 : vector<1x256xf32>
    %362 = vector.broadcast %85 : f32 to vector<1x256xf32>
    %363 = arith.mulf %362, %279 : vector<1x256xf32>
    %364 = arith.addf %361, %363 : vector<1x256xf32>
    %365 = vector.broadcast %92 : f32 to vector<1x256xf32>
    %366 = arith.mulf %365, %281 : vector<1x256xf32>
    %367 = arith.addf %364, %366 : vector<1x256xf32>
    %c2_i32 = arith.constant 2 : i32
    %368 = tpu.dynamic_rotate %367 by %c2_i32 dim 1 : vector<1x256xf32>, i32 -> vector<1x256xf32>
    %369 = arith.mulf %140, %368 : vector<1x256xf32>
    %370 = arith.addf %326, %369 : vector<1x256xf32>
    %371 = vector.broadcast %2 : f32 to vector<1x256xf32>
    %372 = arith.mulf %371, %257 : vector<1x256xf32>
    %373 = vector.broadcast %9 : f32 to vector<1x256xf32>
    %374 = arith.mulf %373, %259 : vector<1x256xf32>
    %375 = arith.addf %372, %374 : vector<1x256xf32>
    %376 = vector.broadcast %16 : f32 to vector<1x256xf32>
    %377 = arith.mulf %376, %261 : vector<1x256xf32>
    %378 = arith.addf %375, %377 : vector<1x256xf32>
    %379 = vector.broadcast %23 : f32 to vector<1x256xf32>
    %380 = arith.mulf %379, %262 : vector<1x256xf32>
    %381 = arith.addf %378, %380 : vector<1x256xf32>
    %382 = vector.broadcast %30 : f32 to vector<1x256xf32>
    %383 = arith.mulf %382, %264 : vector<1x256xf32>
    %384 = arith.addf %381, %383 : vector<1x256xf32>
    %385 = vector.broadcast %37 : f32 to vector<1x256xf32>
    %386 = arith.mulf %385, %266 : vector<1x256xf32>
    %387 = arith.addf %384, %386 : vector<1x256xf32>
    %388 = vector.broadcast %44 : f32 to vector<1x256xf32>
    %389 = arith.mulf %388, %268 : vector<1x256xf32>
    %390 = arith.addf %387, %389 : vector<1x256xf32>
    %391 = vector.broadcast %51 : f32 to vector<1x256xf32>
    %392 = arith.mulf %391, %270 : vector<1x256xf32>
    %393 = arith.addf %390, %392 : vector<1x256xf32>
    %394 = vector.broadcast %58 : f32 to vector<1x256xf32>
    %395 = arith.mulf %394, %272 : vector<1x256xf32>
    %396 = arith.addf %393, %395 : vector<1x256xf32>
    %397 = vector.broadcast %65 : f32 to vector<1x256xf32>
    %398 = arith.mulf %397, %274 : vector<1x256xf32>
    %399 = arith.addf %396, %398 : vector<1x256xf32>
    %400 = vector.broadcast %72 : f32 to vector<1x256xf32>
    %401 = arith.mulf %400, %275 : vector<1x256xf32>
    %402 = arith.addf %399, %401 : vector<1x256xf32>
    %403 = vector.broadcast %79 : f32 to vector<1x256xf32>
    %404 = arith.mulf %403, %277 : vector<1x256xf32>
    %405 = arith.addf %402, %404 : vector<1x256xf32>
    %406 = vector.broadcast %86 : f32 to vector<1x256xf32>
    %407 = arith.mulf %406, %279 : vector<1x256xf32>
    %408 = arith.addf %405, %407 : vector<1x256xf32>
    %409 = vector.broadcast %93 : f32 to vector<1x256xf32>
    %410 = arith.mulf %409, %281 : vector<1x256xf32>
    %411 = arith.addf %408, %410 : vector<1x256xf32>
    %c1_i32 = arith.constant 1 : i32
    %412 = tpu.dynamic_rotate %411 by %c1_i32 dim 1 : vector<1x256xf32>, i32 -> vector<1x256xf32>
    %413 = arith.mulf %156, %412 : vector<1x256xf32>
    %414 = arith.addf %370, %413 : vector<1x256xf32>
    %415 = vector.broadcast %3 : f32 to vector<1x256xf32>
    %416 = arith.mulf %415, %257 : vector<1x256xf32>
    %417 = vector.broadcast %10 : f32 to vector<1x256xf32>
    %418 = arith.mulf %417, %259 : vector<1x256xf32>
    %419 = arith.addf %416, %418 : vector<1x256xf32>
    %420 = vector.broadcast %17 : f32 to vector<1x256xf32>
    %421 = arith.mulf %420, %261 : vector<1x256xf32>
    %422 = arith.addf %419, %421 : vector<1x256xf32>
    %423 = vector.broadcast %24 : f32 to vector<1x256xf32>
    %424 = arith.mulf %423, %262 : vector<1x256xf32>
    %425 = arith.addf %422, %424 : vector<1x256xf32>
    %426 = vector.broadcast %31 : f32 to vector<1x256xf32>
    %427 = arith.mulf %426, %264 : vector<1x256xf32>
    %428 = arith.addf %425, %427 : vector<1x256xf32>
    %429 = vector.broadcast %38 : f32 to vector<1x256xf32>
    %430 = arith.mulf %429, %266 : vector<1x256xf32>
    %431 = arith.addf %428, %430 : vector<1x256xf32>
    %432 = vector.broadcast %45 : f32 to vector<1x256xf32>
    %433 = arith.mulf %432, %268 : vector<1x256xf32>
    %434 = arith.addf %431, %433 : vector<1x256xf32>
    %435 = vector.broadcast %52 : f32 to vector<1x256xf32>
    %436 = arith.mulf %435, %270 : vector<1x256xf32>
    %437 = arith.addf %434, %436 : vector<1x256xf32>
    %438 = vector.broadcast %59 : f32 to vector<1x256xf32>
    %439 = arith.mulf %438, %272 : vector<1x256xf32>
    %440 = arith.addf %437, %439 : vector<1x256xf32>
    %441 = vector.broadcast %66 : f32 to vector<1x256xf32>
    %442 = arith.mulf %441, %274 : vector<1x256xf32>
    %443 = arith.addf %440, %442 : vector<1x256xf32>
    %444 = vector.broadcast %73 : f32 to vector<1x256xf32>
    %445 = arith.mulf %444, %275 : vector<1x256xf32>
    %446 = arith.addf %443, %445 : vector<1x256xf32>
    %447 = vector.broadcast %80 : f32 to vector<1x256xf32>
    %448 = arith.mulf %447, %277 : vector<1x256xf32>
    %449 = arith.addf %446, %448 : vector<1x256xf32>
    %450 = vector.broadcast %87 : f32 to vector<1x256xf32>
    %451 = arith.mulf %450, %279 : vector<1x256xf32>
    %452 = arith.addf %449, %451 : vector<1x256xf32>
    %453 = vector.broadcast %94 : f32 to vector<1x256xf32>
    %454 = arith.mulf %453, %281 : vector<1x256xf32>
    %455 = arith.addf %452, %454 : vector<1x256xf32>
    %456 = arith.mulf %172, %455 : vector<1x256xf32>
    %457 = arith.addf %414, %456 : vector<1x256xf32>
    %458 = vector.broadcast %4 : f32 to vector<1x256xf32>
    %459 = arith.mulf %458, %257 : vector<1x256xf32>
    %460 = vector.broadcast %11 : f32 to vector<1x256xf32>
    %461 = arith.mulf %460, %259 : vector<1x256xf32>
    %462 = arith.addf %459, %461 : vector<1x256xf32>
    %463 = vector.broadcast %18 : f32 to vector<1x256xf32>
    %464 = arith.mulf %463, %261 : vector<1x256xf32>
    %465 = arith.addf %462, %464 : vector<1x256xf32>
    %466 = vector.broadcast %25 : f32 to vector<1x256xf32>
    %467 = arith.mulf %466, %262 : vector<1x256xf32>
    %468 = arith.addf %465, %467 : vector<1x256xf32>
    %469 = vector.broadcast %32 : f32 to vector<1x256xf32>
    %470 = arith.mulf %469, %264 : vector<1x256xf32>
    %471 = arith.addf %468, %470 : vector<1x256xf32>
    %472 = vector.broadcast %39 : f32 to vector<1x256xf32>
    %473 = arith.mulf %472, %266 : vector<1x256xf32>
    %474 = arith.addf %471, %473 : vector<1x256xf32>
    %475 = vector.broadcast %46 : f32 to vector<1x256xf32>
    %476 = arith.mulf %475, %268 : vector<1x256xf32>
    %477 = arith.addf %474, %476 : vector<1x256xf32>
    %478 = vector.broadcast %53 : f32 to vector<1x256xf32>
    %479 = arith.mulf %478, %270 : vector<1x256xf32>
    %480 = arith.addf %477, %479 : vector<1x256xf32>
    %481 = vector.broadcast %60 : f32 to vector<1x256xf32>
    %482 = arith.mulf %481, %272 : vector<1x256xf32>
    %483 = arith.addf %480, %482 : vector<1x256xf32>
    %484 = vector.broadcast %67 : f32 to vector<1x256xf32>
    %485 = arith.mulf %484, %274 : vector<1x256xf32>
    %486 = arith.addf %483, %485 : vector<1x256xf32>
    %487 = vector.broadcast %74 : f32 to vector<1x256xf32>
    %488 = arith.mulf %487, %275 : vector<1x256xf32>
    %489 = arith.addf %486, %488 : vector<1x256xf32>
    %490 = vector.broadcast %81 : f32 to vector<1x256xf32>
    %491 = arith.mulf %490, %277 : vector<1x256xf32>
    %492 = arith.addf %489, %491 : vector<1x256xf32>
    %493 = vector.broadcast %88 : f32 to vector<1x256xf32>
    %494 = arith.mulf %493, %279 : vector<1x256xf32>
    %495 = arith.addf %492, %494 : vector<1x256xf32>
    %496 = vector.broadcast %95 : f32 to vector<1x256xf32>
    %497 = arith.mulf %496, %281 : vector<1x256xf32>
    %498 = arith.addf %495, %497 : vector<1x256xf32>
    %c255_i32 = arith.constant 255 : i32
    %499 = tpu.dynamic_rotate %498 by %c255_i32 dim 1 : vector<1x256xf32>, i32 -> vector<1x256xf32>
    %500 = arith.mulf %188, %499 : vector<1x256xf32>
    %501 = arith.addf %457, %500 : vector<1x256xf32>
    %502 = vector.broadcast %5 : f32 to vector<1x256xf32>
    %503 = arith.mulf %502, %257 : vector<1x256xf32>
    %504 = vector.broadcast %12 : f32 to vector<1x256xf32>
    %505 = arith.mulf %504, %259 : vector<1x256xf32>
    %506 = arith.addf %503, %505 : vector<1x256xf32>
    %507 = vector.broadcast %19 : f32 to vector<1x256xf32>
    %508 = arith.mulf %507, %261 : vector<1x256xf32>
    %509 = arith.addf %506, %508 : vector<1x256xf32>
    %510 = vector.broadcast %26 : f32 to vector<1x256xf32>
    %511 = arith.mulf %510, %262 : vector<1x256xf32>
    %512 = arith.addf %509, %511 : vector<1x256xf32>
    %513 = vector.broadcast %33 : f32 to vector<1x256xf32>
    %514 = arith.mulf %513, %264 : vector<1x256xf32>
    %515 = arith.addf %512, %514 : vector<1x256xf32>
    %516 = vector.broadcast %40 : f32 to vector<1x256xf32>
    %517 = arith.mulf %516, %266 : vector<1x256xf32>
    %518 = arith.addf %515, %517 : vector<1x256xf32>
    %519 = vector.broadcast %47 : f32 to vector<1x256xf32>
    %520 = arith.mulf %519, %268 : vector<1x256xf32>
    %521 = arith.addf %518, %520 : vector<1x256xf32>
    %522 = vector.broadcast %54 : f32 to vector<1x256xf32>
    %523 = arith.mulf %522, %270 : vector<1x256xf32>
    %524 = arith.addf %521, %523 : vector<1x256xf32>
    %525 = vector.broadcast %61 : f32 to vector<1x256xf32>
    %526 = arith.mulf %525, %272 : vector<1x256xf32>
    %527 = arith.addf %524, %526 : vector<1x256xf32>
    %528 = vector.broadcast %68 : f32 to vector<1x256xf32>
    %529 = arith.mulf %528, %274 : vector<1x256xf32>
    %530 = arith.addf %527, %529 : vector<1x256xf32>
    %531 = vector.broadcast %75 : f32 to vector<1x256xf32>
    %532 = arith.mulf %531, %275 : vector<1x256xf32>
    %533 = arith.addf %530, %532 : vector<1x256xf32>
    %534 = vector.broadcast %82 : f32 to vector<1x256xf32>
    %535 = arith.mulf %534, %277 : vector<1x256xf32>
    %536 = arith.addf %533, %535 : vector<1x256xf32>
    %537 = vector.broadcast %89 : f32 to vector<1x256xf32>
    %538 = arith.mulf %537, %279 : vector<1x256xf32>
    %539 = arith.addf %536, %538 : vector<1x256xf32>
    %540 = vector.broadcast %96 : f32 to vector<1x256xf32>
    %541 = arith.mulf %540, %281 : vector<1x256xf32>
    %542 = arith.addf %539, %541 : vector<1x256xf32>
    %c254_i32 = arith.constant 254 : i32
    %543 = tpu.dynamic_rotate %542 by %c254_i32 dim 1 : vector<1x256xf32>, i32 -> vector<1x256xf32>
    %544 = arith.mulf %204, %543 : vector<1x256xf32>
    %545 = arith.addf %501, %544 : vector<1x256xf32>
    %546 = vector.broadcast %6 : f32 to vector<1x256xf32>
    %547 = arith.mulf %546, %257 : vector<1x256xf32>
    %548 = vector.broadcast %13 : f32 to vector<1x256xf32>
    %549 = arith.mulf %548, %259 : vector<1x256xf32>
    %550 = arith.addf %547, %549 : vector<1x256xf32>
    %551 = vector.broadcast %20 : f32 to vector<1x256xf32>
    %552 = arith.mulf %551, %261 : vector<1x256xf32>
    %553 = arith.addf %550, %552 : vector<1x256xf32>
    %554 = vector.broadcast %27 : f32 to vector<1x256xf32>
    %555 = arith.mulf %554, %262 : vector<1x256xf32>
    %556 = arith.addf %553, %555 : vector<1x256xf32>
    %557 = vector.broadcast %34 : f32 to vector<1x256xf32>
    %558 = arith.mulf %557, %264 : vector<1x256xf32>
    %559 = arith.addf %556, %558 : vector<1x256xf32>
    %560 = vector.broadcast %41 : f32 to vector<1x256xf32>
    %561 = arith.mulf %560, %266 : vector<1x256xf32>
    %562 = arith.addf %559, %561 : vector<1x256xf32>
    %563 = vector.broadcast %48 : f32 to vector<1x256xf32>
    %564 = arith.mulf %563, %268 : vector<1x256xf32>
    %565 = arith.addf %562, %564 : vector<1x256xf32>
    %566 = vector.broadcast %55 : f32 to vector<1x256xf32>
    %567 = arith.mulf %566, %270 : vector<1x256xf32>
    %568 = arith.addf %565, %567 : vector<1x256xf32>
    %569 = vector.broadcast %62 : f32 to vector<1x256xf32>
    %570 = arith.mulf %569, %272 : vector<1x256xf32>
    %571 = arith.addf %568, %570 : vector<1x256xf32>
    %572 = vector.broadcast %69 : f32 to vector<1x256xf32>
    %573 = arith.mulf %572, %274 : vector<1x256xf32>
    %574 = arith.addf %571, %573 : vector<1x256xf32>
    %575 = vector.broadcast %76 : f32 to vector<1x256xf32>
    %576 = arith.mulf %575, %275 : vector<1x256xf32>
    %577 = arith.addf %574, %576 : vector<1x256xf32>
    %578 = vector.broadcast %83 : f32 to vector<1x256xf32>
    %579 = arith.mulf %578, %277 : vector<1x256xf32>
    %580 = arith.addf %577, %579 : vector<1x256xf32>
    %581 = vector.broadcast %90 : f32 to vector<1x256xf32>
    %582 = arith.mulf %581, %279 : vector<1x256xf32>
    %583 = arith.addf %580, %582 : vector<1x256xf32>
    %584 = vector.broadcast %97 : f32 to vector<1x256xf32>
    %585 = arith.mulf %584, %281 : vector<1x256xf32>
    %586 = arith.addf %583, %585 : vector<1x256xf32>
    %c253_i32 = arith.constant 253 : i32
    %587 = tpu.dynamic_rotate %586 by %c253_i32 dim 1 : vector<1x256xf32>, i32 -> vector<1x256xf32>
    %588 = arith.mulf %220, %587 : vector<1x256xf32>
    %589 = arith.addf %545, %588 : vector<1x256xf32>
    %590 = arith.negf %589 : vector<1x256xf32>
    %591 = math.exp %590 : vector<1x256xf32>
    %cst_83 = arith.constant 1.000000e+00 : f32
    %592 = vector.broadcast %cst_83 : f32 to vector<1x256xf32>
    %593 = arith.addf %592, %591 : vector<1x256xf32>
    %594 = arith.divf %592, %593 : vector<1x256xf32>
    %595 = vector.broadcast %594 : vector<1x256xf32> to vector<32x256xf32>
    %596 = arith.mulf %249, %595 : vector<32x256xf32>
    %c0_84 = arith.constant 0 : index
    %c0_85 = arith.constant 0 : index
    %c0_86 = arith.constant 0 : index
    %597 = vector.load %arg1[%c0_84, %c0_85, %c0_86] : memref<1x32x256xf32, #tpu.memory_space<vmem>>, vector<1x32x256xf32>
    %598 = vector.shape_cast %597 : vector<1x32x256xf32> to vector<32x256xf32>
    %599 = arith.addf %596, %598 : vector<32x256xf32>
    %c0_87 = arith.constant 0 : index
    %c0_88 = arith.constant 0 : index
    %c0_89 = arith.constant 0 : index
    %600 = vector.load %arg8[%c0_87, %c0_88, %c0_89] : memref<1x32x256xf32, #tpu.memory_space<vmem>>, vector<1x32x256xf32>
    %601 = vector.shape_cast %600 : vector<1x32x256xf32> to vector<32x256xf32>
    %602 = vector.shape_cast %599 : vector<32x256xf32> to vector<1x32x256xf32>
    tpu.vector_store %arg8[%c0_87, %c0_88, %c0_89], %602 {strides = array<i32>} : memref<1x32x256xf32, #tpu.memory_space<vmem>>, vector<1x32x256xf32>,
    return
  }
  func.func @transform_0(%arg0: i32) -> (i32, i32, i32) {
    %c0_i32 = arith.constant 0 : i32
    %c0_i32_0 = arith.constant 0 : i32
    %c0_i32_1 = arith.constant 0 : i32
    return %arg0, %c0_i32, %c0_i32_0 : i32, i32, i32
  }
  func.func @transform_1(%arg0: i32) -> (i32, i32) {
    %c0_i32 = arith.constant 0 : i32
    %c0_i32_0 = arith.constant 0 : i32
    %c0_i32_1 = arith.constant 0 : i32
    return %c0_i32, %c0_i32_0 : i32, i32
  }
  func.func @transform_2(%arg0: i32) -> (i32, i32) {
    %c0_i32 = arith.constant 0 : i32
    %c0_i32_0 = arith.constant 0 : i32
    %c0_i32_1 = arith.constant 0 : i32
    return %c0_i32, %c0_i32_0 : i32, i32
  }
  func.func @transform_3(%arg0: i32) -> (i32, i32) {
    %c0_i32 = arith.constant 0 : i32
    %c0_i32_0 = arith.constant 0 : i32
    %c0_i32_1 = arith.constant 0 : i32
    return %c0_i32, %c0_i32_0 : i32, i32
  }
  func.func @transform_4(%arg0: i32) -> (i32, i32) {
    %c0_i32 = arith.constant 0 : i32
    %c0_i32_0 = arith.constant 0 : i32
    %c0_i32_1 = arith.constant 0 : i32
    return %c0_i32, %c0_i32_0 : i32, i32
  }
  func.func @transform_5(%arg0: i32) -> i32 {
    %c0_i32 = arith.constant 0 : i32
    %c0_i32_0 = arith.constant 0 : i32
    return %c0_i32 : i32
  }
  func.func @transform_6(%arg0: i32) -> i32 {
    %c0_i32 = arith.constant 0 : i32
    %c0_i32_0 = arith.constant 0 : i32
    return %c0_i32 : i32
  }
  func.func @transform_7(%arg0: i32) -> (i32, i32, i32) {
    %c0_i32 = arith.constant 0 : i32
    %c0_i32_0 = arith.constant 0 : i32
    %c0_i32_1 = arith.constant 0 : i32
    return %arg0, %c0_i32, %c0_i32_0 : i32, i32, i32
  }
}

</mosaic_0001>

<llo_original>
// kernel: light_cbam_forward.1
$region0: #{light_cbam_forward.1}
  #allocation0 [shape = 'u32[]', space=smem, size = 0x4, offset = 0x4, fixed_abs, tag = 'smem constant byte address 0x4 - core index']
  #allocation1 [shape = 'u32[144,128]{1,0:T(1,128)}', space=vmem, size = 0x12000, scoped, tag = 'internal scratch']
  #allocation2 [shape = 'f32[1]{0:T(128)S(6)}', space=smem, size = 0x200, scoped, tag = 'scoped memory for light_cbam_forward.1']
  %s0 = inlined_call_operand.vmem [shape: f32[2,32,256], index: 0, kind: input, shape index: {}]
  %s1 = inlined_call_operand.vmem [shape: f32[32,2], index: 1, kind: input, shape index: {}]
  %s2 = inlined_call_operand.vmem [shape: f32[1,2], index: 2, kind: input, shape index: {}]
  %s3 = inlined_call_operand.vmem [shape: f32[32,2], index: 3, kind: input, shape index: {}]
  %s4 = inlined_call_operand.vmem [shape: f32[32,1], index: 4, kind: input, shape index: {}]
  %s5 = inlined_call_operand.vmem [shape: f32[98], index: 5, kind: input, shape index: {}]
  %s6 = inlined_call_operand.<no memory space> [shape: f32[1], index: 6, kind: input, shape index: {}]
  %s7 = inlined_call_operand.vmem [shape: f32[2,32,256], index: 7, kind: output, shape index: {}]
  %s8 = sld [smem:[#allocation0]]
  $region65: #{light_cbam_forward.1} parent=0
    _
  %s10 = ssub.s32 1, %s8
  %s11 = scalar_select 0, %s10, %s8
  %12 = sst [smem:[#allocation2]] %s6
  $region1: #{light_cbam_forward.1} parent=0
    #allocation3 [shape = 'u8[512]{0}', space=smem, size = 0x200, scoped, tag = 'input window, operand 5, single buffered']
    #allocation4 [shape = 's32[2]{0}', space=sflag, size = 0x8, scoped, tag = 'scoped memory for light_cbam_forward.1']
    %13 = vsyncpa [#allocation4], 0
    loop: start=0, step=1, limit=4
    $region2: #{light_cbam_forward.1} parent=1 // loop_pre_header
      _
    $region3: #{light_cbam_forward.1} parent=1 // loop_header
      %s15 = sphi 0, %s19
      %p16 = scmp.ge.s32.totalorder %s15, 4
      %s25 = sphi 0, %s27
      %s28 = sphi 0, %s25
      %s29 = sphi 0, %s28
      %s45 = sphi 0, %s29
      %s49 = sphi 0, %s49
      %s51 = sphi 0, %s49
      %s52 = sphi 0, %s51
      %s66 = sphi 0, %s52
      %s70 = sphi 0, %s70
      %s72 = sphi 0, %s70
      %s73 = sphi 0, %s72
      %s87 = sphi 0, %s73
      %s91 = sphi 0, %s91
      %s93 = sphi 0, %s91
      %s94 = sphi 0, %s93
      %s108 = sphi 0, %s94
      %s112 = sphi 0, %s112
      %s114 = sphi 0, %s112
      %s115 = sphi 0, %s114
      %s129 = sphi 0, %s115
      %s133 = sphi 0, %s133
      %s135 = sphi 0, %s133
      %s136 = sphi 0, %s135
      %s150 = sphi 0, %s136
      %s154 = sphi 0, %s154
      %s156 = sphi 0, %s154
      %s157 = sphi 0, %s156
      %s171 = sphi 0, %s157
      %s177 = sphi 0, %s179
      %s180 = sphi 0, %s177
      %s181 = sphi 0, %s180
      %s197 = sphi 0, %s181
    $region4: #{light_cbam_forward.1} parent=1 // loop_header_branch
      %18 = sbr.rel (%p16) target = $region8
    $region5: #{light_cbam_forward.1} parent=1 // loop_body
      %s20 = ssub.s32 %s15, 1
      %s21 = ssub.s32 %s15, 2
      %s22 = sadd.s32 %s15, 1
      %s23 = ssub.s32 %s15, %s22
      %p24 = scmp.eq.s32.totalorder %s23, 0
      %s26 = sadd.s32 %s25, 1
      %s27 = scalar_select %p24, %s25, %s26
      %p30 = pneg %p24
      %p31 = scmp.eq.s32.totalorder %s15, 1
      %p32 = por %p30, %p31
      %p33 = scmp.ne.s32.totalorder %s25, %s28
      %p34 = scmp.eq.s32.totalorder %s15, 0
      %p35 = por %p33, %p34
      %p36 = scmp.ne.s32.totalorder %s25, %s28
      %p37 = scmp.eq.s32.totalorder %s20, 1
      %p38 = por %p36, %p37
      %p39 = scmp.ne.s32.totalorder %s28, %s29
      %p40 = scmp.eq.s32.totalorder %s20, 0
      %p41 = por %p39, %p40
      %p42 = scmp.ne.s32.totalorder %s28, %s29
      %p43 = scmp.eq.s32.totalorder %s21, 1
      %p44 = por %p42, %p43
      %p46 = scmp.ne.s32.totalorder %s29, %s45
      %p47 = scmp.eq.s32.totalorder %s21, 0
      %p48 = por %p46, %p47
      %s50 = sadd.s32 %s49, 1
      %p53 = scmp.eq.s32.totalorder %s15, 1
      %p54 = scmp.ne.s32.totalorder %s49, %s51
      %p55 = scmp.eq.s32.totalorder %s15, 0
      %p56 = por %p54, %p55
      %p57 = scmp.ne.s32.totalorder %s49, %s51
      %p58 = scmp.eq.s32.totalorder %s20, 1
      %p59 = por %p57, %p58
      %p60 = scmp.ne.s32.totalorder %s51, %s52
      %p61 = scmp.eq.s32.totalorder %s20, 0
      %p62 = por %p60, %p61
      %p63 = scmp.ne.s32.totalorder %s51, %s52
      %p64 = scmp.eq.s32.totalorder %s21, 1
      %p65 = por %p63, %p64
      %p67 = scmp.ne.s32.totalorder %s52, %s66
      %p68 = scmp.eq.s32.totalorder %s21, 0
      %p69 = por %p67, %p68
      %s71 = sadd.s32 %s70, 1
      %p74 = scmp.eq.s32.totalorder %s15, 1
      %p75 = scmp.ne.s32.totalorder %s70, %s72
      %p76 = scmp.eq.s32.totalorder %s15, 0
      %p77 = por %p75, %p76
      %p78 = scmp.ne.s32.totalorder %s70, %s72
      %p79 = scmp.eq.s32.totalorder %s20, 1
      %p80 = por %p78, %p79
      %p81 = scmp.ne.s32.totalorder %s72, %s73
      %p82 = scmp.eq.s32.totalorder %s20, 0
      %p83 = por %p81, %p82
      %p84 = scmp.ne.s32.totalorder %s72, %s73
      %p85 = scmp.eq.s32.totalorder %s21, 1
      %p86 = por %p84, %p85
      %p88 = scmp.ne.s32.totalorder %s73, %s87
      %p89 = scmp.eq.s32.totalorder %s21, 0
      %p90 = por %p88, %p89
      %s92 = sadd.s32 %s91, 1
      %p95 = scmp.eq.s32.totalorder %s15, 1
      %p96 = scmp.ne.s32.totalorder %s91, %s93
      %p97 = scmp.eq.s32.totalorder %s15, 0
      %p98 = por %p96, %p97
      %p99 = scmp.ne.s32.totalorder %s91, %s93
      %p100 = scmp.eq.s32.totalorder %s20, 1
      %p101 = por %p99, %p100
      %p102 = scmp.ne.s32.totalorder %s93, %s94
      %p103 = scmp.eq.s32.totalorder %s20, 0
      %p104 = por %p102, %p103
      %p105 = scmp.ne.s32.totalorder %s93, %s94
      %p106 = scmp.eq.s32.totalorder %s21, 1
      %p107 = por %p105, %p106
      %p109 = scmp.ne.s32.totalorder %s94, %s108
      %p110 = scmp.eq.s32.totalorder %s21, 0
      %p111 = por %p109, %p110
      %s113 = sadd.s32 %s112, 1
      %p116 = scmp.eq.s32.totalorder %s15, 1
      %p117 = scmp.ne.s32.totalorder %s112, %s114
      %p118 = scmp.eq.s32.totalorder %s15, 0
      %p119 = por %p117, %p118
      %p120 = scmp.ne.s32.totalorder %s112, %s114
      %p121 = scmp.eq.s32.totalorder %s20, 1
      %p122 = por %p120, %p121
      %p123 = scmp.ne.s32.totalorder %s114, %s115
      %p124 = scmp.eq.s32.totalorder %s20, 0
      %p125 = por %p123, %p124
      %p126 = scmp.ne.s32.totalorder %s114, %s115
      %p127 = scmp.eq.s32.totalorder %s21, 1
      %p128 = por %p126, %p127
      %p130 = scmp.ne.s32.totalorder %s115, %s129
      %p131 = scmp.eq.s32.totalorder %s21, 0
      %p132 = por %p130, %p131
      %s134 = sadd.s32 %s133, 1
      %p137 = scmp.eq.s32.totalorder %s15, 1
      %p138 = scmp.ne.s32.totalorder %s133, %s135
      %p139 = scmp.eq.s32.totalorder %s15, 0
      %p140 = por %p138, %p139
      %p141 = scmp.ne.s32.totalorder %s133, %s135
      %p142 = scmp.eq.s32.totalorder %s20, 1
      %p143 = por %p141, %p142
      %p144 = scmp.ne.s32.totalorder %s135, %s136
      %p145 = scmp.eq.s32.totalorder %s20, 0
      %p146 = por %p144, %p145
      %p147 = scmp.ne.s32.totalorder %s135, %s136
      %p148 = scmp.eq.s32.totalorder %s21, 1
      %p149 = por %p147, %p148
      %p151 = scmp.ne.s32.totalorder %s136, %s150
      %p152 = scmp.eq.s32.totalorder %s21, 0
      %p153 = por %p151, %p152
      %s155 = sadd.s32 %s154, 1
      %p158 = scmp.eq.s32.totalorder %s15, 1
      %p159 = scmp.ne.s32.totalorder %s154, %s156
      %p160 = scmp.eq.s32.totalorder %s15, 0
      %p161 = por %p159, %p160
      %p162 = scmp.ne.s32.totalorder %s154, %s156
      %p163 = scmp.eq.s32.totalorder %s20, 1
      %p164 = por %p162, %p163
      %p165 = scmp.ne.s32.totalorder %s156, %s157
      %p166 = scmp.eq.s32.totalorder %s20, 0
      %p167 = por %p165, %p166
      %p168 = scmp.ne.s32.totalorder %s156, %s157
      %p169 = scmp.eq.s32.totalorder %s21, 1
      %p170 = por %p168, %p169
      %p172 = scmp.ne.s32.totalorder %s157, %s171
      %p173 = scmp.eq.s32.totalorder %s21, 0
      %p174 = por %p172, %p173
      %s175 = ssub.s32 %s15, %s22
      %p176 = scmp.eq.s32.totalorder %s175, 0
      %s178 = sadd.s32 %s177, 1
      %s179 = scalar_select %p176, %s177, %s178
      %p182 = pneg %p176
      %p183 = scmp.eq.s32.totalorder %s15, 1
      %p184 = por %p182, %p183
      %p185 = scmp.ne.s32.totalorder %s177, %s180
      %p186 = scmp.eq.s32.totalorder %s15, 0
      %p187 = por %p185, %p186
      %p188 = scmp.ne.s32.totalorder %s177, %s180
      %p189 = scmp.eq.s32.totalorder %s20, 1
      %p190 = por %p188, %p189
      %p191 = scmp.ne.s32.totalorder %s180, %s181
      %p192 = scmp.eq.s32.totalorder %s20, 0
      %p193 = por %p191, %p192
      %p194 = scmp.ne.s32.totalorder %s180, %s181
      %p195 = scmp.eq.s32.totalorder %s21, 1
      %p196 = por %p194, %p195
      %p198 = scmp.ne.s32.totalorder %s181, %s197
      %p199 = scmp.eq.s32.totalorder %s21, 0
      %p200 = por %p198, %p199
      %p201 = scmp.le.s32.totalorder 1, %s15
      %p202 = scmp.lt.s32.totalorder %s15, 3
      %p203 = pnand %p201, %p202
      %p204 = pneg %p203
      // Predicated region
      $region9: #{light_cbam_forward.1} parent=5 // pred_check
        _
      $region10: #{light_cbam_forward.1} parent=5 // pred_check_branch
        %206 = sbr.rel (%p203) target = $region12
      $region11: #{light_cbam_forward.1} parent=5 // pred_region
        %s207 = ssub.s32 %s15, 1
        // Predicated region
        $region13: #{light_cbam_forward.1} parent=11 // pred_check
          %p208 = pneg %p62
        $region14: #{light_cbam_forward.1} parent=11 // pred_check_branch
          %210 = sbr.rel (%p208) target = $region16
        $region15: #{light_cbam_forward.1} parent=11 // pred_region
          _
        $region16: #{light_cbam_forward.1} parent=11 // pred_fallthru
          _
        // Predicated region
        $region17: #{light_cbam_forward.1} parent=11 // pred_check
          %p211 = pneg %p83
        $region18: #{light_cbam_forward.1} parent=11 // pred_check_branch
          %213 = sbr.rel (%p211) target = $region20
        $region19: #{light_cbam_forward.1} parent=11 // pred_region
          _
        $region20: #{light_cbam_forward.1} parent=11 // pred_fallthru
          _
        // Predicated region
        $region21: #{light_cbam_forward.1} parent=11 // pred_check
          %p214 = pneg %p104
        $region22: #{light_cbam_forward.1} parent=11 // pred_check_branch
          %216 = sbr.rel (%p214) target = $region24
        $region23: #{light_cbam_forward.1} parent=11 // pred_region
          _
        $region24: #{light_cbam_forward.1} parent=11 // pred_fallthru
          _
        // Predicated region
        $region25: #{light_cbam_forward.1} parent=11 // pred_check
          %p217 = pneg %p125
        $region26: #{light_cbam_forward.1} parent=11 // pred_check_branch
          %219 = sbr.rel (%p217) target = $region28
        $region27: #{light_cbam_forward.1} parent=11 // pred_region
          _
        $region28: #{light_cbam_forward.1} parent=11 // pred_fallthru
          _
        // Predicated region
        $region29: #{light_cbam_forward.1} parent=11 // pred_check
          %p220 = pneg %p146
        $region30: #{light_cbam_forward.1} parent=11 // pred_check_branch
          %222 = sbr.rel (%p220) target = $region32
        $region31: #{light_cbam_forward.1} parent=11 // pred_region
          %s224 = ssub.s32 16, 16
          %225 = vsyncadd [#allocation4], %s224
          %s227 = sshll.u32 %s5, 4
          %s228 = int_to_ptr.vmem [resolvable:$true] %s227
          %230 = dma.vmem_to_smem %s228, 16, [#allocation3], [#allocation4]
        $region32: #{light_cbam_forward.1} parent=11 // pred_fallthru
          _
        // Predicated region
        $region33: #{light_cbam_forward.1} parent=11 // pred_check
          %p231 = pneg %p167
        $region34: #{light_cbam_forward.1} parent=11 // pred_check_branch
          %233 = sbr.rel (%p231) target = $region36
        $region35: #{light_cbam_forward.1} parent=11 // pred_region
          _
        $region36: #{light_cbam_forward.1} parent=11 // pred_fallthru
          _
      $region12: #{light_cbam_forward.1} parent=5 // pred_fallthru
        _
      %p234 = scmp.lt.s32.totalorder %s15, 2
      // Predicated region
      $region37: #{light_cbam_forward.1} parent=5 // pred_check
        %p235 = pneg %p234
      $region38: #{light_cbam_forward.1} parent=5 // pred_check_branch
        %237 = sbr.rel (%p235) target = $region40
      $region39: #{light_cbam_forward.1} parent=5 // pred_region
        // Predicated region
        $region41: #{light_cbam_forward.1} parent=39 // pred_check
          %p238 = pneg %p35
        $region42: #{light_cbam_forward.1} parent=39 // pred_check_branch
          %240 = sbr.rel (%p238) target = $region44
        $region43: #{light_cbam_forward.1} parent=39 // pred_region
          %p241 = scmp.lt.s32.totalorder %s15, 1
          %s242 = scalar_select %p241, %s15, 1
          %s243 = smul.addr %s242, 8
          %s244 = smul.addr %s243, 8
          %s245 = scalar_lea.vmem %s0, %s244
        $region44: #{light_cbam_forward.1} parent=39 // pred_fallthru
          _
      $region40: #{light_cbam_forward.1} parent=5 // pred_fallthru
        _
      %p246 = scmp.le.s32.totalorder 1, %s15
      %p247 = scmp.lt.s32.totalorder %s15, 3
      %p248 = pnand %p246, %p247
      %p249 = pneg %p248
      // Predicated region
      $region45: #{light_cbam_forward.1} parent=5 // pred_check
        _
      $region46: #{light_cbam_forward.1} parent=5 // pred_check_branch
        %251 = sbr.rel (%p248) target = $region48
      $region47: #{light_cbam_forward.1} parent=5 // pred_region
        %s252 = ssub.s32 %s15, 1
        // Predicated region
        $region49: #{light_cbam_forward.1} parent=47 // pred_check
          %p253 = pneg %p146
        $region50: #{light_cbam_forward.1} parent=47 // pred_check_branch
          %255 = sbr.rel (%p253) target = $region52
        $region51: #{light_cbam_forward.1} parent=47 // pred_region
          %256 = dma.done [#allocation4], 16
        $region52: #{light_cbam_forward.1} parent=47 // pred_fallthru
          _
        %257 = sfence
        %p258 = scmp.lt.s32.totalorder %s20, 1
        %s259 = scalar_select %p258, %s20, 1
        %s260 = smul.addr %s259, 8
        %s261 = smul.addr %s260, 8
        %s262 = scalar_lea.vmem %s0, %s261
        %p263 = pneg %p41
        %p264 = pneg %p38
        %p265 = pneg %p62
        %p266 = pneg %p59
        %p267 = pneg %p83
        %p268 = pneg %p80
        %p269 = pneg %p104
        %p270 = pneg %p101
        %p271 = pneg %p125
        %p272 = pneg %p122
        %p273 = pneg %p146
        %p274 = pneg %p143
        %p275 = pneg %p167
        %p276 = pneg %p164
        %p277 = pneg %p193
        %p278 = pneg %p190
        %p279 = scmp.lt.s32.totalorder %s20, 1
        %s280 = scalar_select %p279, %s20, 1
        %s281 = smul.addr %s280, 8
        %s282 = smul.addr %s281, 8
        %s283 = scalar_lea.vmem %s7, %s282
        %p284 = scmp.lt.s32.totalorder %s20, 1
        %s285 = scalar_select %p284, %s20, 1
        %s286 = smul.addr %s285, 8
        %s287 = smul.addr %s286, 8
        %s288 = scalar_lea.vmem %s0, %s287
        %p289 = scmp.lt.s32.totalorder %s20, 1
        %s290 = scalar_select %p289, %s20, 1
        %s291 = smul.addr %s290, 8
        %s292 = smul.addr %s291, 8
        %s293 = scalar_lea.vmem %s7, %s292
        %s294 = sld [smem:[#allocation3]]
        %s295 = sld [smem:[#allocation3 + $0x1]]
        %s296 = sld [smem:[#allocation3 + $0x2]]
        %s297 = sld [smem:[#allocation3 + $0x3]]
        %s298 = sld [smem:[#allocation3 + $0x4]]
        %s299 = sld [smem:[#allocation3 + $0x5]]
        %s300 = sld [smem:[#allocation3 + $0x6]]
        %s301 = sld [smem:[#allocation3 + $0x7]]
        %s302 = sld [smem:[#allocation3 + $0x8]]
        %s303 = sld [smem:[#allocation3 + $0x9]]
        %s304 = sld [smem:[#allocation3 + $0xa]]
        %s305 = sld [smem:[#allocation3 + $0xb]]
        %s306 = sld [smem:[#allocation3 + $0xc]]
        %s307 = sld [smem:[#allocation3 + $0xd]]
        %s308 = sld [smem:[#allocation3 + $0xe]]
        %s309 = sld [smem:[#allocation3 + $0xf]]
        %s310 = sld [smem:[#allocation3 + $0x10]]
        %s311 = sld [smem:[#allocation3 + $0x11]]
        %s312 = sld [smem:[#allocation3 + $0x12]]
        %s313 = sld [smem:[#allocation3 + $0x13]]
        %s314 = sld [smem:[#allocation3 + $0x14]]
        %s315 = sld [smem:[#allocation3 + $0x15]]
        %s316 = sld [smem:[#allocation3 + $0x16]]
        %s317 = sld [smem:[#allocation3 + $0x17]]
        %s318 = sld [smem:[#allocation3 + $0x18]]
        %s319 = sld [smem:[#allocation3 + $0x19]]
        %s320 = sld [smem:[#allocation3 + $0x1a]]
        %s321 = sld [smem:[#allocation3 + $0x1b]]
        %s322 = sld [smem:[#allocation3 + $0x1c]]
        %s323 = sld [smem:[#allocation3 + $0x1d]]
        %s324 = sld [smem:[#allocation3 + $0x1e]]
        %s325 = sld [smem:[#allocation3 + $0x1f]]
        %s326 = sld [smem:[#allocation3 + $0x20]]
        %s327 = sld [smem:[#allocation3 + $0x21]]
        %s328 = sld [smem:[#allocation3 + $0x22]]
        %s329 = sld [smem:[#allocation3 + $0x23]]
        %s330 = sld [smem:[#allocation3 + $0x24]]
        %s331 = sld [smem:[#allocation3 + $0x25]]
        %s332 = sld [smem:[#allocation3 + $0x26]]
        %s333 = sld [smem:[#allocation3 + $0x27]]
        %s334 = sld [smem:[#allocation3 + $0x28]]
        %s335 = sld [smem:[#allocation3 + $0x29]]
        %s336 = sld [smem:[#allocation3 + $0x2a]]
        %s337 = sld [smem:[#allocation3 + $0x2b]]
        %s338 = sld [smem:[#allocation3 + $0x2c]]
        %s339 = sld [smem:[#allocation3 + $0x2d]]
        %s340 = sld [smem:[#allocation3 + $0x2e]]
        %s341 = sld [smem:[#allocation3 + $0x2f]]
        %s342 = sld [smem:[#allocation3 + $0x30]]
        %s343 = sld [smem:[#allocation3 + $0x31]]
        %s344 = sld [smem:[#allocation3 + $0x32]]
        %s345 = sld [smem:[#allocation3 + $0x33]]
        %s346 = sld [smem:[#allocation3 + $0x34]]
        %s347 = sld [smem:[#allocation3 + $0x35]]
        %s348 = sld [smem:[#allocation3 + $0x36]]
        %s349 = sld [smem:[#allocation3 + $0x37]]
        %s350 = sld [smem:[#allocation3 + $0x38]]
        %s351 = sld [smem:[#allocation3 + $0x39]]
        %s352 = sld [smem:[#allocation3 + $0x3a]]
        %s353 = sld [smem:[#allocation3 + $0x3b]]
        %s354 = sld [smem:[#allocation3 + $0x3c]]
        %s355 = sld [smem:[#allocation3 + $0x3d]]
        %s356 = sld [smem:[#allocation3 + $0x3e]]
        %s357 = sld [smem:[#allocation3 + $0x3f]]
        %s358 = sld [smem:[#allocation3 + $0x40]]
        %s359 = sld [smem:[#allocation3 + $0x41]]
        %s360 = sld [smem:[#allocation3 + $0x42]]
        %s361 = sld [smem:[#allocation3 + $0x43]]
        %s362 = sld [smem:[#allocation3 + $0x44]]
        %s363 = sld [smem:[#allocation3 + $0x45]]
        %s364 = sld [smem:[#allocation3 + $0x46]]
        %s365 = sld [smem:[#allocation3 + $0x47]]
        %s366 = sld [smem:[#allocation3 + $0x48]]
        %s367 = sld [smem:[#allocation3 + $0x49]]
        %s368 = sld [smem:[#allocation3 + $0x4a]]
        %s369 = sld [smem:[#allocation3 + $0x4b]]
        %s370 = sld [smem:[#allocation3 + $0x4c]]
        %s371 = sld [smem:[#allocation3 + $0x4d]]
        %s372 = sld [smem:[#allocation3 + $0x4e]]
        %s373 = sld [smem:[#allocation3 + $0x4f]]
        %s374 = sld [smem:[#allocation3 + $0x50]]
        %s375 = sld [smem:[#allocation3 + $0x51]]
        %s376 = sld [smem:[#allocation3 + $0x52]]
        %s377 = sld [smem:[#allocation3 + $0x53]]
        %s378 = sld [smem:[#allocation3 + $0x54]]
        %s379 = sld [smem:[#allocation3 + $0x55]]
        %s380 = sld [smem:[#allocation3 + $0x56]]
        %s381 = sld [smem:[#allocation3 + $0x57]]
        %s382 = sld [smem:[#allocation3 + $0x58]]
        %s383 = sld [smem:[#allocation3 + $0x59]]
        %s384 = sld [smem:[#allocation3 + $0x5a]]
        %s385 = sld [smem:[#allocation3 + $0x5b]]
        %s386 = sld [smem:[#allocation3 + $0x5c]]
        %s387 = sld [smem:[#allocation3 + $0x5d]]
        %s388 = sld [smem:[#allocation3 + $0x5e]]
        %s389 = sld [smem:[#allocation3 + $0x5f]]
        %s390 = sld [smem:[#allocation3 + $0x60]]
        %s391 = sld [smem:[#allocation3 + $0x61]]
        %s392 = sld [smem:[#allocation2]]
        %v393 = vlaneseq
        %v394 = vand.u32 %v393, 127
        %v395 = vadd.s32 %v394, 128
        %v396 = vcvt.s32.f32 %v394
        %v397 = vcvt.s32.f32 %v395
        %v398 = vadd.f32 %v396, 0.5
        %v399 = vadd.f32 %v397, 0.5
        %v400 = vmul.f32 %v398, 0.0625
        %v401 = vmul.f32 %v399, 0.0625
        %v402 = vfloor.f32 %v400
        %v403 = vfloor.f32 %v401
        %v404 = vmul.f32 %v402, 16.0
        %v405 = vmul.f32 %v403, 16.0
        %v406 = vsub.f32 %v396, %v404
        %v407 = vsub.f32 %v397, %v405
        %vm408 = vcmp.ge.s32.totalorder %v394, 48
        %vm409 = vcmp.ge.s32.totalorder %v395, 48
        %vm410 = vcmp.lt.s32.totalorder %v394, 256
        %vm411 = vcmp.lt.s32.totalorder %v395, 256
        %vm412 = vmand %vm408, %vm410
        %vm413 = vmand %vm409, %vm411
        %v414 = vsel %vm412, 1.0, 0.0
        %v415 = vsel %vm413, 1.0, 0.0
        %vm416 = vcmp.ge.f32.partialorder %v406, 3.0
        %vm417 = vcmp.ge.f32.partialorder %v407, 3.0
        %vm418 = vcmp.lt.f32.partialorder %v406, 16.0
        %vm419 = vcmp.lt.f32.partialorder %v407, 16.0
        %vm420 = vmand %vm416, %vm418
        %vm421 = vmand %vm417, %vm419
        %v422 = vsel %vm420, 1.0, 0.0
        %v423 = vsel %vm421, 1.0, 0.0
        %vm424 = vcmp.ge.s32.totalorder %v394, 32
        %vm425 = vcmp.ge.s32.totalorder %v395, 32
        %vm426 = vmand %vm424, %vm410
        %vm427 = vmand %vm425, %vm411
        %v428 = vsel %vm426, 1.0, 0.0
        %v429 = vsel %vm427, 1.0, 0.0
        %vm430 = vcmp.ge.f32.partialorder %v406, 2.0
        %vm431 = vcmp.ge.f32.partialorder %v407, 2.0
        %vm432 = vmand %vm430, %vm418
        %vm433 = vmand %vm431, %vm419
        %v434 = vsel %vm432, 1.0, 0.0
        %v435 = vsel %vm433, 1.0, 0.0
        %vm436 = vcmp.ge.s32.totalorder %v394, 16
        %vm437 = vcmp.ge.s32.totalorder %v395, 16
        %vm438 = vmand %vm436, %vm410
        %vm439 = vmand %vm437, %vm411
        %v440 = vsel %vm438, 1.0, 0.0
        %v441 = vsel %vm439, 1.0, 0.0
        %vm442 = vcmp.ge.f32.partialorder %v406, 1.0
        %vm443 = vcmp.ge.f32.partialorder %v407, 1.0
        %vm444 = vmand %vm442, %vm418
        %vm445 = vmand %vm443, %vm419
        %v446 = vsel %vm444, 1.0, 0.0
        %v447 = vsel %vm445, 1.0, 0.0
        %vm448 = vcmp.ge.s32.totalorder %v394, 0
        %vm449 = vcmp.ge.s32.totalorder %v395, 0
        %vm450 = vmand %vm448, %vm410
        %vm451 = vmand %vm449, %vm411
        %v452 = vsel %vm450, 1.0, 0.0
        %v453 = vsel %vm451, 1.0, 0.0
        %vm454 = vcmp.ge.f32.partialorder %v406, 0.0
        %vm455 = vcmp.ge.f32.partialorder %v407, 0.0
        %vm456 = vmand %vm454, %vm418
        %vm457 = vmand %vm455, %vm419
        %v458 = vsel %vm456, 1.0, 0.0
        %v459 = vsel %vm457, 1.0, 0.0
        %vm460 = vcmp.lt.s32.totalorder %v394, 240
        %vm461 = vcmp.lt.s32.totalorder %v395, 240
        %vm462 = vmand %vm448, %vm460
        %vm463 = vmand %vm449, %vm461
        %v464 = vsel %vm462, 1.0, 0.0
        %v465 = vsel %vm463, 1.0, 0.0
        %vm466 = vcmp.lt.f32.partialorder %v406, 15.0
        %vm467 = vcmp.lt.f32.partialorder %v407, 15.0
        %vm468 = vmand %vm454, %vm466
        %vm469 = vmand %vm455, %vm467
        %v470 = vsel %vm468, 1.0, 0.0
        %v471 = vsel %vm469, 1.0, 0.0
        %vm472 = vcmp.lt.s32.totalorder %v394, 224
        %vm473 = vcmp.lt.s32.totalorder %v395, 224
        %vm474 = vmand %vm448, %vm472
        %vm475 = vmand %vm449, %vm473
        %v476 = vsel %vm474, 1.0, 0.0
        %v477 = vsel %vm475, 1.0, 0.0
        %vm478 = vcmp.lt.f32.partialorder %v406, 14.0
        %vm479 = vcmp.lt.f32.partialorder %v407, 14.0
        %vm480 = vmand %vm454, %vm478
        %vm481 = vmand %vm455, %vm479
        %v482 = vsel %vm480, 1.0, 0.0
        %v483 = vsel %vm481, 1.0, 0.0
        %vm484 = vcmp.lt.s32.totalorder %v394, 208
        %vm485 = vcmp.lt.s32.totalorder %v395, 208
        %vm486 = vmand %vm448, %vm484
        %vm487 = vmand %vm449, %vm485
        %v488 = vsel %vm486, 1.0, 0.0
        %v489 = vsel %vm487, 1.0, 0.0
        %vm490 = vcmp.lt.f32.partialorder %v406, 13.0
        %vm491 = vcmp.lt.f32.partialorder %v407, 13.0
        %vm492 = vmand %vm454, %vm490
        %vm493 = vmand %vm455, %vm491
        %v494 = vsel %vm492, 1.0, 0.0
        %v495 = vsel %vm493, 1.0, 0.0
        %v496 = vld [vmem:[%s1] sm:$0xff]
        %v497 = vld [vmem:[%s1 + $0x8] sm:$0xff]
        %v498 = vld [vmem:[%s1 + $0x10] sm:$0xff]
        %v499 = vld [vmem:[%s1 + $0x18] sm:$0xff]
        %v500 = vld [vmem:[%s2] sm:$0x1]
        %v501 = vld [vmem:[%s3] sm:$0xff]
        %v502 = vld [vmem:[%s3 + $0x8] sm:$0xff]
        %v503 = vld [vmem:[%s3 + $0x10] sm:$0xff]
        %v504 = vld [vmem:[%s3 + $0x18] sm:$0xff]
        %v505 = vld [vmem:[%s4] sm:$0xff]
        %v506 = vld [vmem:[%s4 + $0x8] sm:$0xff]
        %v507 = vld [vmem:[%s4 + $0x10] sm:$0xff]
        %v508 = vld [vmem:[%s4 + $0x18] sm:$0xff]
        %v509 = vld [vmem:[%s288] sm:$0xff]
        %v510 = vld [vmem:[%s288 + $0x8] sm:$0xff]
        %v511 = vld [vmem:[%s288 + $0x10] sm:$0xff]
        %v512 = vld [vmem:[%s288 + $0x18] sm:$0xff]
        %v513 = vld [vmem:[%s288 + $0x20] sm:$0xff]
        %v514 = vld [vmem:[%s288 + $0x28] sm:$0xff]
        %v515 = vld [vmem:[%s288 + $0x30] sm:$0xff]
        %v516 = vld [vmem:[%s288 + $0x38] sm:$0xff]
        %v517 = vadd.f32 %v509, %v510
        %518 = vadd.xlane.f32.xlu0 %v517
        %v519 = vpop.xlane.xlu0 %518
        %v520 = vadd.f32 %v511, %v512
        %521 = vadd.xlane.f32.xlu0 %v520
        %v522 = vpop.xlane.xlu0 %521
        %v523 = vadd.f32 %v513, %v514
        %524 = vadd.xlane.f32.xlu0 %v523
        %v525 = vpop.xlane.xlu0 %524
        %v526 = vadd.f32 %v515, %v516
        %527 = vadd.xlane.f32.xlu0 %v526
        %v528 = vpop.xlane.xlu0 %527
        %v529 = vrcp.pop 256.0
        %v530 = vmul.f32 %v519, %v529
        %v531 = vmul.f32 %v522, %v529
        %v532 = vmul.f32 %v525, %v529
        %v533 = vmul.f32 %v528, %v529
        %v534 = vmul.f32 %v496, %v530
        %v535 = vmul.f32 %v497, %v531
        %v536 = vmul.f32 %v498, %v532
        %v537 = vmul.f32 %v499, %v533
        %vm538 = vcmask 15360
        %v539 = vsel %vm538, %v534, 0.0
        %v540 = vsel %vm538, %v535, 0.0
        %v541 = vadd.f32 %v539, %v540
        %v542 = vsel %vm538, %v536, 0.0
        %v543 = vadd.f32 %v541, %v542
        %v544 = vsel %vm538, %v537, 0.0
        %v545 = vadd.f32 %v543, %v544
        %v546 = vrot.slane %v545, 4
        %v547 = vadd.f32 %v545, %v546
        %v548 = vrot.slane %v547, 2
        %v549 = vadd.f32 %v547, %v548
        %v550 = vrot.slane %v549, 1
        %v551 = vadd.f32 %v549, %v550
        %v552 = vadd.f32 %v551, %v500
        %v553 = vmax.f32 %v552, 0.0
        %v554 = vlaneseq
        %v555 = vshrl.u32 %v554, 7
        %v556 = vsub.s32 0, %v555
        %v557 = vrot.slane %v553, %v556
        %v558 = vmul.f32 %v501, %v557
        %v559 = vmul.f32 %v502, %v557
        %v560 = vmul.f32 %v503, %v557
        %v561 = vmul.f32 %v504, %v557
        %v562 = vsel %vm538, %v558, 0.0
        %563 = vadd.xlane.f32.xlu0 %v562
        %v564 = vpop.xlane.xlu0 %563
        %v565 = vsel %vm538, %v559, 0.0
        %566 = vadd.xlane.f32.xlu0 %v565
        %v567 = vpop.xlane.xlu0 %566
        %v568 = vsel %vm538, %v560, 0.0
        %569 = vadd.xlane.f32.xlu0 %v568
        %v570 = vpop.xlane.xlu0 %569
        %v571 = vsel %vm538, %v561, 0.0
        %572 = vadd.xlane.f32.xlu0 %v571
        %v573 = vpop.xlane.xlu0 %572
        %v574 = vadd.f32 %v564, %v505
        %v575 = vadd.f32 %v567, %v506
        %v576 = vadd.f32 %v570, %v507
        %v577 = vadd.f32 %v573, %v508
        %v578 = vxor.u32 %v574, 2147483648
        %v579 = vxor.u32 %v575, 2147483648
        %v580 = vxor.u32 %v576, 2147483648
        %v581 = vxor.u32 %v577, 2147483648
        %v582 = vmul.f32 %v578, 1.442695
        %v583 = vpow.pop %v582
        %v584 = vmul.f32 %v579, 1.442695
        %v585 = vpow.pop %v584
        %v586 = vmul.f32 %v580, 1.442695
        %v587 = vpow.pop %v586
        %v588 = vmul.f32 %v581, 1.442695
        %v589 = vpow.pop %v588
        %v590 = vadd.f32 %v583, 1.0
        %v591 = vadd.f32 %v585, 1.0
        %v592 = vadd.f32 %v587, 1.0
        %v593 = vadd.f32 %v589, 1.0
        %v594 = vrcp.pop %v590
        %v595 = vmul.f32 1.0, %v594
        %v596 = vrcp.pop %v591
        %v597 = vmul.f32 1.0, %v596
        %v598 = vrcp.pop %v592
        %v599 = vmul.f32 1.0, %v598
        %v600 = vrcp.pop %v593
        %v601 = vmul.f32 1.0, %v600
        %603 = vset.pattern.permute.xlu0 0
        %604 = vperm.xlu0 %603, %v595
        %v605 = vpop.permute.xlu0 %604
        %608 = vset.pattern.permute.xlu0 0
        %609 = vperm.xlu0 %608, %v597
        %v610 = vpop.permute.xlu0 %609
        %613 = vset.pattern.permute.xlu0 0
        %614 = vperm.xlu0 %613, %v599
        %v615 = vpop.permute.xlu0 %614
        %618 = vset.pattern.permute.xlu0 0
        %619 = vperm.xlu0 %618, %v601
        %v620 = vpop.permute.xlu0 %619
        %v622 = vmul.f32 %v509, %v605
        %v623 = vmul.f32 %v510, %v605
        %v624 = vmul.f32 %v511, %v610
        %v625 = vmul.f32 %v512, %v610
        %v626 = vmul.f32 %v513, %v615
        %v627 = vmul.f32 %v514, %v615
        %v628 = vmul.f32 %v515, %v620
        %v629 = vmul.f32 %v516, %v620
        %v630 = vadd.f32 %v622, %v624
        %v631 = vadd.f32 %v630, %v626
        %v632 = vadd.f32 %v631, %v628
        %v633 = vrot.slane %v632, 4
        %v634 = vadd.f32 %v632, %v633
        %v635 = vrot.slane %v634, 2
        %v636 = vadd.f32 %v634, %v635
        %v637 = vrot.slane %v636, 1
        %v638 = vadd.f32 %v636, %v637
        %v639 = vadd.f32 %v623, %v625
        %v640 = vadd.f32 %v639, %v627
        %v641 = vadd.f32 %v640, %v629
        %v642 = vrot.slane %v641, 4
        %v643 = vadd.f32 %v641, %v642
        %v644 = vrot.slane %v643, 2
        %v645 = vadd.f32 %v643, %v644
        %v646 = vrot.slane %v645, 1
        %v647 = vadd.f32 %v645, %v646
        %v648 = vrcp.pop 32.0
        %v649 = vmul.f32 %v638, %v648
        %v650 = vmul.f32 %v647, %v648
        %v651 = vmax.f32 %v622, %v626
        %v652 = vmax.f32 %v624, %v628
        %v653 = vmax.f32 %v651, %v652
        %v654 = vrot.slane %v653, 4
        %v655 = vmax.f32 %v653, %v654
        %v656 = vrot.slane %v655, 2
        %v657 = vmax.f32 %v655, %v656
        %v658 = vrot.slane %v657, 1
        %v659 = vmax.f32 %v657, %v658
        %v660 = vmax.f32 %v623, %v627
        %v661 = vmax.f32 %v625, %v629
        %v662 = vmax.f32 %v660, %v661
        %v663 = vrot.slane %v662, 4
        %v664 = vmax.f32 %v662, %v663
        %v665 = vrot.slane %v664, 2
        %v666 = vmax.f32 %v664, %v665
        %v667 = vrot.slane %v666, 1
        %v668 = vmax.f32 %v666, %v667
        %669 = vrot.lane.b32.xlu0 %v649, 48
        %v670 = vpop.permute.xlu0 %669
        %671 = vrot.lane.b32.xlu0 %v650, 48
        %v672 = vpop.permute.xlu0 %671
        %vm673 = vcmp.lt.s32.totalorder %v394, 48
        %v674 = vsel %vm673, %v670, %v672
        %v675 = vsel %vm673, %v672, %v670
        %v676 = vmul.f32 %v414, %v675
        %v677 = vmul.f32 %v415, %v674
        %678 = vrot.lane.b32.xlu0 %v649, 32
        %v679 = vpop.permute.xlu0 %678
        %680 = vrot.lane.b32.xlu0 %v650, 32
        %v681 = vpop.permute.xlu0 %680
        %vm682 = vcmp.lt.s32.totalorder %v394, 32
        %v683 = vsel %vm682, %v679, %v681
        %v684 = vsel %vm682, %v681, %v679
        %v685 = vmul.f32 %v428, %v684
        %v686 = vmul.f32 %v429, %v683
        %687 = vrot.lane.b32.xlu0 %v649, 16
        %v688 = vpop.permute.xlu0 %687
        %689 = vrot.lane.b32.xlu0 %v650, 16
        %v690 = vpop.permute.xlu0 %689
        %vm691 = vcmp.lt.s32.totalorder %v394, 16
        %v692 = vsel %vm691, %v688, %v690
        %v693 = vsel %vm691, %v690, %v688
        %v694 = vmul.f32 %v440, %v693
        %v695 = vmul.f32 %v441, %v692
        %v696 = vmul.f32 %v452, %v649
        %v697 = vmul.f32 %v453, %v650
        %698 = vrot.lane.b32.xlu0 %v649, 112
        %v699 = vpop.permute.xlu0 %698
        %700 = vrot.lane.b32.xlu0 %v650, 112
        %v701 = vpop.permute.xlu0 %700
        %vm702 = vcmp.lt.s32.totalorder %v394, 112
        %v703 = vsel %vm702, %v699, %v701
        %v704 = vsel %vm702, %v701, %v699
        %v705 = vmul.f32 %v464, %v703
        %v706 = vmul.f32 %v465, %v704
        %707 = vrot.lane.b32.xlu0 %v649, 96
        %v708 = vpop.permute.xlu0 %707
        %709 = vrot.lane.b32.xlu0 %v650, 96
        %v710 = vpop.permute.xlu0 %709
        %vm711 = vcmp.lt.s32.totalorder %v394, 96
        %v712 = vsel %vm711, %v708, %v710
        %v713 = vsel %vm711, %v710, %v708
        %v714 = vmul.f32 %v476, %v712
        %v715 = vmul.f32 %v477, %v713
        %716 = vrot.lane.b32.xlu0 %v649, 80
        %v717 = vpop.permute.xlu0 %716
        %718 = vrot.lane.b32.xlu0 %v650, 80
        %v719 = vpop.permute.xlu0 %718
        %vm720 = vcmp.lt.s32.totalorder %v394, 80
        %v721 = vsel %vm720, %v717, %v719
        %v722 = vsel %vm720, %v719, %v717
        %v723 = vmul.f32 %v488, %v721
        %v724 = vmul.f32 %v489, %v722
        %725 = vrot.lane.b32.xlu0 %v659, 48
        %v726 = vpop.permute.xlu0 %725
        %727 = vrot.lane.b32.xlu0 %v668, 48
        %v728 = vpop.permute.xlu0 %727
        %v729 = vsel %vm673, %v726, %v728
        %v730 = vsel %vm673, %v728, %v726
        %v731 = vmul.f32 %v414, %v730
        %v732 = vmul.f32 %v415, %v729
        %733 = vrot.lane.b32.xlu0 %v659, 32
        %v734 = vpop.permute.xlu0 %733
        %735 = vrot.lane.b32.xlu0 %v668, 32
        %v736 = vpop.permute.xlu0 %735
        %v737 = vsel %vm682, %v734, %v736
        %v738 = vsel %vm682, %v736, %v734
        %v739 = vmul.f32 %v428, %v738
        %v740 = vmul.f32 %v429, %v737
        %741 = vrot.lane.b32.xlu0 %v659, 16
        %v742 = vpop.permute.xlu0 %741
        %743 = vrot.lane.b32.xlu0 %v668, 16
        %v744 = vpop.permute.xlu0 %743
        %v745 = vsel %vm691, %v742, %v744
        %v746 = vsel %vm691, %v744, %v742
        %v747 = vmul.f32 %v440, %v746
        %v748 = vmul.f32 %v441, %v745
        %v749 = vmul.f32 %v452, %v659
        %v750 = vmul.f32 %v453, %v668
        %751 = vrot.lane.b32.xlu0 %v659, 112
        %v752 = vpop.permute.xlu0 %751
        %753 = vrot.lane.b32.xlu0 %v668, 112
        %v754 = vpop.permute.xlu0 %753
        %v755 = vsel %vm702, %v752, %v754
        %v756 = vsel %vm702, %v754, %v752
        %v757 = vmul.f32 %v464, %v755
        %v758 = vmul.f32 %v465, %v756
        %759 = vrot.lane.b32.xlu0 %v659, 96
        %v760 = vpop.permute.xlu0 %759
        %761 = vrot.lane.b32.xlu0 %v668, 96
        %v762 = vpop.permute.xlu0 %761
        %v763 = vsel %vm711, %v760, %v762
        %v764 = vsel %vm711, %v762, %v760
        %v765 = vmul.f32 %v476, %v763
        %v766 = vmul.f32 %v477, %v764
        %767 = vrot.lane.b32.xlu0 %v659, 80
        %v768 = vpop.permute.xlu0 %767
        %769 = vrot.lane.b32.xlu0 %v668, 80
        %v770 = vpop.permute.xlu0 %769
        %v771 = vsel %vm720, %v768, %v770
        %v772 = vsel %vm720, %v770, %v768
        %v773 = vmul.f32 %v488, %v771
        %v774 = vmul.f32 %v489, %v772
        %v775 = vstv %s392
        %v776 = vstv %s294
        %v777 = vmul.f32 %v776, %v676
        %v778 = vmul.f32 %v776, %v677
        %v779 = vstv %s301
        %v780 = vmul.f32 %v779, %v685
        %v781 = vmul.f32 %v779, %v686
        %v782 = vadd.f32 %v777, %v780
        %v783 = vadd.f32 %v778, %v781
        %v784 = vstv %s308
        %v785 = vmul.f32 %v784, %v694
        %v786 = vmul.f32 %v784, %v695
        %v787 = vadd.f32 %v782, %v785
        %v788 = vadd.f32 %v783, %v786
        %v789 = vstv %s315
        %v790 = vmul.f32 %v789, %v696
        %v791 = vmul.f32 %v789, %v697
        %v792 = vadd.f32 %v787, %v790
        %v793 = vadd.f32 %v788, %v791
        %v794 = vstv %s322
        %v795 = vmul.f32 %v794, %v705
        %v796 = vmul.f32 %v794, %v706
        %v797 = vadd.f32 %v792, %v795
        %v798 = vadd.f32 %v793, %v796
        %v799 = vstv %s329
        %v800 = vmul.f32 %v799, %v714
        %v801 = vmul.f32 %v799, %v715
        %v802 = vadd.f32 %v797, %v800
        %v803 = vadd.f32 %v798, %v801
        %v804 = vstv %s336
        %v805 = vmul.f32 %v804, %v723
        %v806 = vmul.f32 %v804, %v724
        %v807 = vadd.f32 %v802, %v805
        %v808 = vadd.f32 %v803, %v806
        %v809 = vstv %s343
        %v810 = vmul.f32 %v809, %v731
        %v811 = vmul.f32 %v809, %v732
        %v812 = vadd.f32 %v807, %v810
        %v813 = vadd.f32 %v808, %v811
        %v814 = vstv %s350
        %v815 = vmul.f32 %v814, %v739
        %v816 = vmul.f32 %v814, %v740
        %v817 = vadd.f32 %v812, %v815
        %v818 = vadd.f32 %v813, %v816
        %v819 = vstv %s357
        %v820 = vmul.f32 %v819, %v747
        %v821 = vmul.f32 %v819, %v748
        %v822 = vadd.f32 %v817, %v820
        %v823 = vadd.f32 %v818, %v821
        %v824 = vstv %s364
        %v825 = vmul.f32 %v824, %v749
        %v826 = vmul.f32 %v824, %v750
        %v827 = vadd.f32 %v822, %v825
        %v828 = vadd.f32 %v823, %v826
        %v829 = vstv %s371
        %v830 = vmul.f32 %v829, %v757
        %v831 = vmul.f32 %v829, %v758
        %v832 = vadd.f32 %v827, %v830
        %v833 = vadd.f32 %v828, %v831
        %v834 = vstv %s378
        %v835 = vmul.f32 %v834, %v765
        %v836 = vmul.f32 %v834, %v766
        %v837 = vadd.f32 %v832, %v835
        %v838 = vadd.f32 %v833, %v836
        %v839 = vstv %s385
        %v840 = vmul.f32 %v839, %v773
        %v841 = vmul.f32 %v839, %v774
        %v842 = vadd.f32 %v837, %v840
        %v843 = vadd.f32 %v838, %v841
        %844 = vrot.lane.b32.xlu0 %v842, 3
        %v845 = vpop.permute.xlu0 %844
        %846 = vrot.lane.b32.xlu0 %v843, 3
        %v847 = vpop.permute.xlu0 %846
        %vm848 = vcmp.lt.s32.totalorder %v394, 3
        %v849 = vsel %vm848, %v845, %v847
        %v850 = vsel %vm848, %v847, %v845
        %v851 = vmul.f32 %v422, %v850
        %v852 = vmul.f32 %v423, %v849
        %v853 = vadd.f32 %v775, %v851
        %v854 = vadd.f32 %v775, %v852
        %v855 = vstv %s295
        %v856 = vmul.f32 %v855, %v676
        %v857 = vmul.f32 %v855, %v677
        %v858 = vstv %s302
        %v859 = vmul.f32 %v858, %v685
        %v860 = vmul.f32 %v858, %v686
        %v861 = vadd.f32 %v856, %v859
        %v862 = vadd.f32 %v857, %v860
        %v863 = vstv %s309
        %v864 = vmul.f32 %v863, %v694
        %v865 = vmul.f32 %v863, %v695
        %v866 = vadd.f32 %v861, %v864
        %v867 = vadd.f32 %v862, %v865
        %v868 = vstv %s316
        %v869 = vmul.f32 %v868, %v696
        %v870 = vmul.f32 %v868, %v697
        %v871 = vadd.f32 %v866, %v869
        %v872 = vadd.f32 %v867, %v870
        %v873 = vstv %s323
        %v874 = vmul.f32 %v873, %v705
        %v875 = vmul.f32 %v873, %v706
        %v876 = vadd.f32 %v871, %v874
        %v877 = vadd.f32 %v872, %v875
        %v878 = vstv %s330
        %v879 = vmul.f32 %v878, %v714
        %v880 = vmul.f32 %v878, %v715
        %v881 = vadd.f32 %v876, %v879
        %v882 = vadd.f32 %v877, %v880
        %v883 = vstv %s337
        %v884 = vmul.f32 %v883, %v723
        %v885 = vmul.f32 %v883, %v724
        %v886 = vadd.f32 %v881, %v884
        %v887 = vadd.f32 %v882, %v885
        %v888 = vstv %s344
        %v889 = vmul.f32 %v888, %v731
        %v890 = vmul.f32 %v888, %v732
        %v891 = vadd.f32 %v886, %v889
        %v892 = vadd.f32 %v887, %v890
        %v893 = vstv %s351
        %v894 = vmul.f32 %v893, %v739
        %v895 = vmul.f32 %v893, %v740
        %v896 = vadd.f32 %v891, %v894
        %v897 = vadd.f32 %v892, %v895
        %v898 = vstv %s358
        %v899 = vmul.f32 %v898, %v747
        %v900 = vmul.f32 %v898, %v748
        %v901 = vadd.f32 %v896, %v899
        %v902 = vadd.f32 %v897, %v900
        %v903 = vstv %s365
        %v904 = vmul.f32 %v903, %v749
        %v905 = vmul.f32 %v903, %v750
        %v906 = vadd.f32 %v901, %v904
        %v907 = vadd.f32 %v902, %v905
        %v908 = vstv %s372
        %v909 = vmul.f32 %v908, %v757
        %v910 = vmul.f32 %v908, %v758
        %v911 = vadd.f32 %v906, %v909
        %v912 = vadd.f32 %v907, %v910
        %v913 = vstv %s379
        %v914 = vmul.f32 %v913, %v765
        %v915 = vmul.f32 %v913, %v766
        %v916 = vadd.f32 %v911, %v914
        %v917 = vadd.f32 %v912, %v915
        %v918 = vstv %s386
        %v919 = vmul.f32 %v918, %v773
        %v920 = vmul.f32 %v918, %v774
        %v921 = vadd.f32 %v916, %v919
        %v922 = vadd.f32 %v917, %v920
        %923 = vrot.lane.b32.xlu0 %v921, 2
        %v924 = vpop.permute.xlu0 %923
        %925 = vrot.lane.b32.xlu0 %v922, 2
        %v926 = vpop.permute.xlu0 %925
        %vm927 = vcmp.lt.s32.totalorder %v394, 2
        %v928 = vsel %vm927, %v924, %v926
        %v929 = vsel %vm927, %v926, %v924
        %v930 = vmul.f32 %v434, %v929
        %v931 = vmul.f32 %v435, %v928
        %v932 = vadd.f32 %v853, %v930
        %v933 = vadd.f32 %v854, %v931
        %v934 = vstv %s296
        %v935 = vmul.f32 %v934, %v676
        %v936 = vmul.f32 %v934, %v677
        %v937 = vstv %s303
        %v938 = vmul.f32 %v937, %v685
        %v939 = vmul.f32 %v937, %v686
        %v940 = vadd.f32 %v935, %v938
        %v941 = vadd.f32 %v936, %v939
        %v942 = vstv %s310
        %v943 = vmul.f32 %v942, %v694
        %v944 = vmul.f32 %v942, %v695
        %v945 = vadd.f32 %v940, %v943
        %v946 = vadd.f32 %v941, %v944
        %v947 = vstv %s317
        %v948 = vmul.f32 %v947, %v696
        %v949 = vmul.f32 %v947, %v697
        %v950 = vadd.f32 %v945, %v948
        %v951 = vadd.f32 %v946, %v949
        %v952 = vstv %s324
        %v953 = vmul.f32 %v952, %v705
        %v954 = vmul.f32 %v952, %v706
        %v955 = vadd.f32 %v950, %v953
        %v956 = vadd.f32 %v951, %v954
        %v957 = vstv %s331
        %v958 = vmul.f32 %v957, %v714
        %v959 = vmul.f32 %v957, %v715
        %v960 = vadd.f32 %v955, %v958
        %v961 = vadd.f32 %v956, %v959
        %v962 = vstv %s338
        %v963 = vmul.f32 %v962, %v723
        %v964 = vmul.f32 %v962, %v724
        %v965 = vadd.f32 %v960, %v963
        %v966 = vadd.f32 %v961, %v964
        %v967 = vstv %s345
        %v968 = vmul.f32 %v967, %v731
        %v969 = vmul.f32 %v967, %v732
        %v970 = vadd.f32 %v965, %v968
        %v971 = vadd.f32 %v966, %v969
        %v972 = vstv %s352
        %v973 = vmul.f32 %v972, %v739
        %v974 = vmul.f32 %v972, %v740
        %v975 = vadd.f32 %v970, %v973
        %v976 = vadd.f32 %v971, %v974
        %v977 = vstv %s359
        %v978 = vmul.f32 %v977, %v747
        %v979 = vmul.f32 %v977, %v748
        %v980 = vadd.f32 %v975, %v978
        %v981 = vadd.f32 %v976, %v979
        %v982 = vstv %s366
        %v983 = vmul.f32 %v982, %v749
        %v984 = vmul.f32 %v982, %v750
        %v985 = vadd.f32 %v980, %v983
        %v986 = vadd.f32 %v981, %v984
        %v987 = vstv %s373
        %v988 = vmul.f32 %v987, %v757
        %v989 = vmul.f32 %v987, %v758
        %v990 = vadd.f32 %v985, %v988
        %v991 = vadd.f32 %v986, %v989
        %v992 = vstv %s380
        %v993 = vmul.f32 %v992, %v765
        %v994 = vmul.f32 %v992, %v766
        %v995 = vadd.f32 %v990, %v993
        %v996 = vadd.f32 %v991, %v994
        %v997 = vstv %s387
        %v998 = vmul.f32 %v997, %v773
        %v999 = vmul.f32 %v997, %v774
        %v1000 = vadd.f32 %v995, %v998
        %v1001 = vadd.f32 %v996, %v999
        %1002 = vrot.lane.b32.xlu0 %v1000, 1
        %v1003 = vpop.permute.xlu0 %1002
        %1004 = vrot.lane.b32.xlu0 %v1001, 1
        %v1005 = vpop.permute.xlu0 %1004
        %vm1006 = vcmp.lt.s32.totalorder %v394, 1
        %v1007 = vsel %vm1006, %v1003, %v1005
        %v1008 = vsel %vm1006, %v1005, %v1003
        %v1009 = vmul.f32 %v446, %v1008
        %v1010 = vmul.f32 %v447, %v1007
        %v1011 = vadd.f32 %v932, %v1009
        %v1012 = vadd.f32 %v933, %v1010
        %v1013 = vstv %s297
        %v1014 = vmul.f32 %v1013, %v676
        %v1015 = vmul.f32 %v1013, %v677
        %v1016 = vstv %s304
        %v1017 = vmul.f32 %v1016, %v685
        %v1018 = vmul.f32 %v1016, %v686
        %v1019 = vadd.f32 %v1014, %v1017
        %v1020 = vadd.f32 %v1015, %v1018
        %v1021 = vstv %s311
        %v1022 = vmul.f32 %v1021, %v694
        %v1023 = vmul.f32 %v1021, %v695
        %v1024 = vadd.f32 %v1019, %v1022
        %v1025 = vadd.f32 %v1020, %v1023
        %v1026 = vstv %s318
        %v1027 = vmul.f32 %v1026, %v696
        %v1028 = vmul.f32 %v1026, %v697
        %v1029 = vadd.f32 %v1024, %v1027
        %v1030 = vadd.f32 %v1025, %v1028
        %v1031 = vstv %s325
        %v1032 = vmul.f32 %v1031, %v705
        %v1033 = vmul.f32 %v1031, %v706
        %v1034 = vadd.f32 %v1029, %v1032
        %v1035 = vadd.f32 %v1030, %v1033
        %v1036 = vstv %s332
        %v1037 = vmul.f32 %v1036, %v714
        %v1038 = vmul.f32 %v1036, %v715
        %v1039 = vadd.f32 %v1034, %v1037
        %v1040 = vadd.f32 %v1035, %v1038
        %v1041 = vstv %s339
        %v1042 = vmul.f32 %v1041, %v723
        %v1043 = vmul.f32 %v1041, %v724
        %v1044 = vadd.f32 %v1039, %v1042
        %v1045 = vadd.f32 %v1040, %v1043
        %v1046 = vstv %s346
        %v1047 = vmul.f32 %v1046, %v731
        %v1048 = vmul.f32 %v1046, %v732
        %v1049 = vadd.f32 %v1044, %v1047
        %v1050 = vadd.f32 %v1045, %v1048
        %v1051 = vstv %s353
        %v1052 = vmul.f32 %v1051, %v739
        %v1053 = vmul.f32 %v1051, %v740
        %v1054 = vadd.f32 %v1049, %v1052
        %v1055 = vadd.f32 %v1050, %v1053
        %v1056 = vstv %s360
        %v1057 = vmul.f32 %v1056, %v747
        %v1058 = vmul.f32 %v1056, %v748
        %v1059 = vadd.f32 %v1054, %v1057
        %v1060 = vadd.f32 %v1055, %v1058
        %v1061 = vstv %s367
        %v1062 = vmul.f32 %v1061, %v749
        %v1063 = vmul.f32 %v1061, %v750
        %v1064 = vadd.f32 %v1059, %v1062
        %v1065 = vadd.f32 %v1060, %v1063
        %v1066 = vstv %s374
        %v1067 = vmul.f32 %v1066, %v757
        %v1068 = vmul.f32 %v1066, %v758
        %v1069 = vadd.f32 %v1064, %v1067
        %v1070 = vadd.f32 %v1065, %v1068
        %v1071 = vstv %s381
        %v1072 = vmul.f32 %v1071, %v765
        %v1073 = vmul.f32 %v1071, %v766
        %v1074 = vadd.f32 %v1069, %v1072
        %v1075 = vadd.f32 %v1070, %v1073
        %v1076 = vstv %s388
        %v1077 = vmul.f32 %v1076, %v773
        %v1078 = vmul.f32 %v1076, %v774
        %v1079 = vadd.f32 %v1074, %v1077
        %v1080 = vadd.f32 %v1075, %v1078
        %v1081 = vmul.f32 %v458, %v1079
        %v1082 = vmul.f32 %v459, %v1080
        %v1083 = vadd.f32 %v1011, %v1081
        %v1084 = vadd.f32 %v1012, %v1082
        %v1085 = vstv %s298
        %v1086 = vmul.f32 %v1085, %v676
        %v1087 = vmul.f32 %v1085, %v677
        %v1088 = vstv %s305
        %v1089 = vmul.f32 %v1088, %v685
        %v1090 = vmul.f32 %v1088, %v686
        %v1091 = vadd.f32 %v1086, %v1089
        %v1092 = vadd.f32 %v1087, %v1090
        %v1093 = vstv %s312
        %v1094 = vmul.f32 %v1093, %v694
        %v1095 = vmul.f32 %v1093, %v695
        %v1096 = vadd.f32 %v1091, %v1094
        %v1097 = vadd.f32 %v1092, %v1095
        %v1098 = vstv %s319
        %v1099 = vmul.f32 %v1098, %v696
        %v1100 = vmul.f32 %v1098, %v697
        %v1101 = vadd.f32 %v1096, %v1099
        %v1102 = vadd.f32 %v1097, %v1100
        %v1103 = vstv %s326
        %v1104 = vmul.f32 %v1103, %v705
        %v1105 = vmul.f32 %v1103, %v706
        %v1106 = vadd.f32 %v1101, %v1104
        %v1107 = vadd.f32 %v1102, %v1105
        %v1108 = vstv %s333
        %v1109 = vmul.f32 %v1108, %v714
        %v1110 = vmul.f32 %v1108, %v715
        %v1111 = vadd.f32 %v1106, %v1109
        %v1112 = vadd.f32 %v1107, %v1110
        %v1113 = vstv %s340
        %v1114 = vmul.f32 %v1113, %v723
        %v1115 = vmul.f32 %v1113, %v724
        %v1116 = vadd.f32 %v1111, %v1114
        %v1117 = vadd.f32 %v1112, %v1115
        %v1118 = vstv %s347
        %v1119 = vmul.f32 %v1118, %v731
        %v1120 = vmul.f32 %v1118, %v732
        %v1121 = vadd.f32 %v1116, %v1119
        %v1122 = vadd.f32 %v1117, %v1120
        %v1123 = vstv %s354
        %v1124 = vmul.f32 %v1123, %v739
        %v1125 = vmul.f32 %v1123, %v740
        %v1126 = vadd.f32 %v1121, %v1124
        %v1127 = vadd.f32 %v1122, %v1125
        %v1128 = vstv %s361
        %v1129 = vmul.f32 %v1128, %v747
        %v1130 = vmul.f32 %v1128, %v748
        %v1131 = vadd.f32 %v1126, %v1129
        %v1132 = vadd.f32 %v1127, %v1130
        %v1133 = vstv %s368
        %v1134 = vmul.f32 %v1133, %v749
        %v1135 = vmul.f32 %v1133, %v750
        %v1136 = vadd.f32 %v1131, %v1134
        %v1137 = vadd.f32 %v1132, %v1135
        %v1138 = vstv %s375
        %v1139 = vmul.f32 %v1138, %v757
        %v1140 = vmul.f32 %v1138, %v758
        %v1141 = vadd.f32 %v1136, %v1139
        %v1142 = vadd.f32 %v1137, %v1140
        %v1143 = vstv %s382
        %v1144 = vmul.f32 %v1143, %v765
        %v1145 = vmul.f32 %v1143, %v766
        %v1146 = vadd.f32 %v1141, %v1144
        %v1147 = vadd.f32 %v1142, %v1145
        %v1148 = vstv %s389
        %v1149 = vmul.f32 %v1148, %v773
        %v1150 = vmul.f32 %v1148, %v774
        %v1151 = vadd.f32 %v1146, %v1149
        %v1152 = vadd.f32 %v1147, %v1150
        %1153 = vrot.lane.b32.xlu0 %v1151, 127
        %v1154 = vpop.permute.xlu0 %1153
        %1155 = vrot.lane.b32.xlu0 %v1152, 127
        %v1156 = vpop.permute.xlu0 %1155
        %vm1157 = vcmp.lt.s32.totalorder %v394, 127
        %v1158 = vsel %vm1157, %v1154, %v1156
        %v1159 = vsel %vm1157, %v1156, %v1154
        %v1160 = vmul.f32 %v470, %v1158
        %v1161 = vmul.f32 %v471, %v1159
        %v1162 = vadd.f32 %v1083, %v1160
        %v1163 = vadd.f32 %v1084, %v1161
        %v1164 = vstv %s299
        %v1165 = vmul.f32 %v1164, %v676
        %v1166 = vmul.f32 %v1164, %v677
        %v1167 = vstv %s306
        %v1168 = vmul.f32 %v1167, %v685
        %v1169 = vmul.f32 %v1167, %v686
        %v1170 = vadd.f32 %v1165, %v1168
        %v1171 = vadd.f32 %v1166, %v1169
        %v1172 = vstv %s313
        %v1173 = vmul.f32 %v1172, %v694
        %v1174 = vmul.f32 %v1172, %v695
        %v1175 = vadd.f32 %v1170, %v1173
        %v1176 = vadd.f32 %v1171, %v1174
        %v1177 = vstv %s320
        %v1178 = vmul.f32 %v1177, %v696
        %v1179 = vmul.f32 %v1177, %v697
        %v1180 = vadd.f32 %v1175, %v1178
        %v1181 = vadd.f32 %v1176, %v1179
        %v1182 = vstv %s327
        %v1183 = vmul.f32 %v1182, %v705
        %v1184 = vmul.f32 %v1182, %v706
        %v1185 = vadd.f32 %v1180, %v1183
        %v1186 = vadd.f32 %v1181, %v1184
        %v1187 = vstv %s334
        %v1188 = vmul.f32 %v1187, %v714
        %v1189 = vmul.f32 %v1187, %v715
        %v1190 = vadd.f32 %v1185, %v1188
        %v1191 = vadd.f32 %v1186, %v1189
        %v1192 = vstv %s341
        %v1193 = vmul.f32 %v1192, %v723
        %v1194 = vmul.f32 %v1192, %v724
        %v1195 = vadd.f32 %v1190, %v1193
        %v1196 = vadd.f32 %v1191, %v1194
        %v1197 = vstv %s348
        %v1198 = vmul.f32 %v1197, %v731
        %v1199 = vmul.f32 %v1197, %v732
        %v1200 = vadd.f32 %v1195, %v1198
        %v1201 = vadd.f32 %v1196, %v1199
        %v1202 = vstv %s355
        %v1203 = vmul.f32 %v1202, %v739
        %v1204 = vmul.f32 %v1202, %v740
        %v1205 = vadd.f32 %v1200, %v1203
        %v1206 = vadd.f32 %v1201, %v1204
        %v1207 = vstv %s362
        %v1208 = vmul.f32 %v1207, %v747
        %v1209 = vmul.f32 %v1207, %v748
        %v1210 = vadd.f32 %v1205, %v1208
        %v1211 = vadd.f32 %v1206, %v1209
        %v1212 = vstv %s369
        %v1213 = vmul.f32 %v1212, %v749
        %v1214 = vmul.f32 %v1212, %v750
        %v1215 = vadd.f32 %v1210, %v1213
        %v1216 = vadd.f32 %v1211, %v1214
        %v1217 = vstv %s376
        %v1218 = vmul.f32 %v1217, %v757
        %v1219 = vmul.f32 %v1217, %v758
        %v1220 = vadd.f32 %v1215, %v1218
        %v1221 = vadd.f32 %v1216, %v1219
        %v1222 = vstv %s383
        %v1223 = vmul.f32 %v1222, %v765
        %v1224 = vmul.f32 %v1222, %v766
        %v1225 = vadd.f32 %v1220, %v1223
        %v1226 = vadd.f32 %v1221, %v1224
        %v1227 = vstv %s390
        %v1228 = vmul.f32 %v1227, %v773
        %v1229 = vmul.f32 %v1227, %v774
        %v1230 = vadd.f32 %v1225, %v1228
        %v1231 = vadd.f32 %v1226, %v1229
        %1232 = vrot.lane.b32.xlu0 %v1230, 126
        %v1233 = vpop.permute.xlu0 %1232
        %1234 = vrot.lane.b32.xlu0 %v1231, 126
        %v1235 = vpop.permute.xlu0 %1234
        %vm1236 = vcmp.lt.s32.totalorder %v394, 126
        %v1237 = vsel %vm1236, %v1233, %v1235
        %v1238 = vsel %vm1236, %v1235, %v1233
        %v1239 = vmul.f32 %v482, %v1237
        %v1240 = vmul.f32 %v483, %v1238
        %v1241 = vadd.f32 %v1162, %v1239
        %v1242 = vadd.f32 %v1163, %v1240
        %v1243 = vstv %s300
        %v1244 = vmul.f32 %v1243, %v676
        %v1245 = vmul.f32 %v1243, %v677
        %v1246 = vstv %s307
        %v1247 = vmul.f32 %v1246, %v685
        %v1248 = vmul.f32 %v1246, %v686
        %v1249 = vadd.f32 %v1244, %v1247
        %v1250 = vadd.f32 %v1245, %v1248
        %v1251 = vstv %s314
        %v1252 = vmul.f32 %v1251, %v694
        %v1253 = vmul.f32 %v1251, %v695
        %v1254 = vadd.f32 %v1249, %v1252
        %v1255 = vadd.f32 %v1250, %v1253
        %v1256 = vstv %s321
        %v1257 = vmul.f32 %v1256, %v696
        %v1258 = vmul.f32 %v1256, %v697
        %v1259 = vadd.f32 %v1254, %v1257
        %v1260 = vadd.f32 %v1255, %v1258
        %v1261 = vstv %s328
        %v1262 = vmul.f32 %v1261, %v705
        %v1263 = vmul.f32 %v1261, %v706
        %v1264 = vadd.f32 %v1259, %v1262
        %v1265 = vadd.f32 %v1260, %v1263
        %v1266 = vstv %s335
        %v1267 = vmul.f32 %v1266, %v714
        %v1268 = vmul.f32 %v1266, %v715
        %v1269 = vadd.f32 %v1264, %v1267
        %v1270 = vadd.f32 %v1265, %v1268
        %v1271 = vstv %s342
        %v1272 = vmul.f32 %v1271, %v723
        %v1273 = vmul.f32 %v1271, %v724
        %v1274 = vadd.f32 %v1269, %v1272
        %v1275 = vadd.f32 %v1270, %v1273
        %v1276 = vstv %s349
        %v1277 = vmul.f32 %v1276, %v731
        %v1278 = vmul.f32 %v1276, %v732
        %v1279 = vadd.f32 %v1274, %v1277
        %v1280 = vadd.f32 %v1275, %v1278
        %v1281 = vstv %s356
        %v1282 = vmul.f32 %v1281, %v739
        %v1283 = vmul.f32 %v1281, %v740
        %v1284 = vadd.f32 %v1279, %v1282
        %v1285 = vadd.f32 %v1280, %v1283
        %v1286 = vstv %s363
        %v1287 = vmul.f32 %v1286, %v747
        %v1288 = vmul.f32 %v1286, %v748
        %v1289 = vadd.f32 %v1284, %v1287
        %v1290 = vadd.f32 %v1285, %v1288
        %v1291 = vstv %s370
        %v1292 = vmul.f32 %v1291, %v749
        %v1293 = vmul.f32 %v1291, %v750
        %v1294 = vadd.f32 %v1289, %v1292
        %v1295 = vadd.f32 %v1290, %v1293
        %v1296 = vstv %s377
        %v1297 = vmul.f32 %v1296, %v757
        %v1298 = vmul.f32 %v1296, %v758
        %v1299 = vadd.f32 %v1294, %v1297
        %v1300 = vadd.f32 %v1295, %v1298
        %v1301 = vstv %s384
        %v1302 = vmul.f32 %v1301, %v765
        %v1303 = vmul.f32 %v1301, %v766
        %v1304 = vadd.f32 %v1299, %v1302
        %v1305 = vadd.f32 %v1300, %v1303
        %v1306 = vstv %s391
        %v1307 = vmul.f32 %v1306, %v773
        %v1308 = vmul.f32 %v1306, %v774
        %v1309 = vadd.f32 %v1304, %v1307
        %v1310 = vadd.f32 %v1305, %v1308
        %1311 = vrot.lane.b32.xlu0 %v1309, 125
        %v1312 = vpop.permute.xlu0 %1311
        %1313 = vrot.lane.b32.xlu0 %v1310, 125
        %v1314 = vpop.permute.xlu0 %1313
        %vm1315 = vcmp.lt.s32.totalorder %v394, 125
        %v1316 = vsel %vm1315, %v1312, %v1314
        %v1317 = vsel %vm1315, %v1314, %v1312
        %v1318 = vmul.f32 %v494, %v1316
        %v1319 = vmul.f32 %v495, %v1317
        %v1320 = vadd.f32 %v1241, %v1318
        %v1321 = vadd.f32 %v1242, %v1319
        %v1322 = vxor.u32 %v1320, 2147483648
        %v1323 = vxor.u32 %v1321, 2147483648
        %v1324 = vmul.f32 %v1322, 1.442695
        %v1325 = vpow.pop %v1324
        %v1326 = vmul.f32 %v1323, 1.442695
        %v1327 = vpow.pop %v1326
        %v1328 = vadd.f32 %v1325, 1.0
        %v1329 = vadd.f32 %v1327, 1.0
        %v1330 = vrcp.pop %v1328
        %v1331 = vmul.f32 1.0, %v1330
        %v1332 = vrcp.pop %v1329
        %v1333 = vmul.f32 1.0, %v1332
        %v1334 = vlaneseq
        %v1335 = vshrl.u32 %v1334, 7
        %v1336 = vsub.s32 0, %v1335
        %v1337 = vrot.slane %v1331, %v1336
        %v1338 = vlaneseq
        %v1339 = vshrl.u32 %v1338, 7
        %v1340 = vsub.s32 0, %v1339
        %v1341 = vrot.slane %v1333, %v1340
        %v1342 = vmul.f32 %v622, %v1337
        %v1343 = vmul.f32 %v623, %v1341
        %v1344 = vmul.f32 %v624, %v1337
        %v1345 = vmul.f32 %v625, %v1341
        %v1346 = vmul.f32 %v626, %v1337
        %v1347 = vmul.f32 %v627, %v1341
        %v1348 = vmul.f32 %v628, %v1337
        %v1349 = vmul.f32 %v629, %v1341
        %v1350 = vadd.f32 %v1342, %v509
        %v1351 = vadd.f32 %v1343, %v510
        %v1352 = vadd.f32 %v1344, %v511
        %v1353 = vadd.f32 %v1345, %v512
        %v1354 = vadd.f32 %v1346, %v513
        %v1355 = vadd.f32 %v1347, %v514
        %v1356 = vadd.f32 %v1348, %v515
        %v1357 = vadd.f32 %v1349, %v516
        %1358 = vst [vmem:[%s293] sm:$0xff] %v1350
        %1359 = vst [vmem:[%s293 + $0x8] sm:$0xff] %v1351
        %1360 = vst [vmem:[%s293 + $0x10] sm:$0xff] %v1352
        %1361 = vst [vmem:[%s293 + $0x18] sm:$0xff] %v1353
        %1362 = vst [vmem:[%s293 + $0x20] sm:$0xff] %v1354
        %1363 = vst [vmem:[%s293 + $0x28] sm:$0xff] %v1355
        %1364 = vst [vmem:[%s293 + $0x30] sm:$0xff] %v1356
        %1365 = vst [vmem:[%s293 + $0x38] sm:$0xff] %v1357
        %p1366 = scmp.lt.s32.totalorder %s20, 1
        %s1367 = scalar_select %p1366, %s20, 1
        %s1368 = smul.addr %s1367, 8
        %s1369 = smul.addr %s1368, 8
        %s1370 = scalar_lea.vmem %s7, %s1369
        // Predicated region
        $region53: #{light_cbam_forward.1} parent=47 // pred_check
          %p1371 = pneg %p190
        $region54: #{light_cbam_forward.1} parent=47 // pred_check_branch
          %1373 = sbr.rel (%p1371) target = $region56
        $region55: #{light_cbam_forward.1} parent=47 // pred_region
          _
        $region56: #{light_cbam_forward.1} parent=47 // pred_fallthru
          _
      $region48: #{light_cbam_forward.1} parent=5 // pred_fallthru
        _
      %p1374 = scmp.le.s32.totalorder 2, %s15
      // Predicated region
      $region57: #{light_cbam_forward.1} parent=5 // pred_check
        %p1375 = pneg %p1374
      $region58: #{light_cbam_forward.1} parent=5 // pred_check_branch
        %1377 = sbr.rel (%p1375) target = $region60
      $region59: #{light_cbam_forward.1} parent=5 // pred_region
        %s1378 = ssub.s32 %s15, 2
        // Predicated region
        $region61: #{light_cbam_forward.1} parent=59 // pred_check
          %p1379 = pneg %p196
        $region62: #{light_cbam_forward.1} parent=59 // pred_check_branch
          %1381 = sbr.rel (%p1379) target = $region64
        $region63: #{light_cbam_forward.1} parent=59 // pred_region
          %p1382 = scmp.lt.s32.totalorder %s21, 1
          %s1383 = scalar_select %p1382, %s21, 1
          %s1384 = smul.addr %s1383, 8
          %s1385 = smul.addr %s1384, 8
          %s1386 = scalar_lea.vmem %s7, %s1385
        $region64: #{light_cbam_forward.1} parent=59 // pred_fallthru
          _
      $region60: #{light_cbam_forward.1} parent=5 // pred_fallthru
        _
    $region6: #{light_cbam_forward.1} parent=1 // loop_footer
      %s19 = sadd.s32 1, %s15
    $region7: #{light_cbam_forward.1} parent=1 // loop_footer_branch
      %14 = sbr.rel target = $region3
    $region8: #{light_cbam_forward.1} parent=1 // loop_exit
      _
    %1387 = vsyncpa [#allocation4], 1
    %s1388 = scalar_lea.sflag [#allocation4], 1
    %1389 = vsyncpa %s1388, 1

</llo_original>
